<compile_context>
chip_gen: v6e
topology: v6e:2x2x1
jax: 0.10.0
libtpu: 0.0.40
codegen_flags: <defaults>
</compile_context>

<pallas_src>
import functools

import jax
import jax.numpy as jnp
from jax.experimental import pallas as pl
from jax.experimental.pallas import tpu as pltpu


# ------------------------------ fused Pallas kernel ------------------------------
def _upblock_kernel(*refs, n_convs, b_tile, h, w, ch, cs, co):
    """Processes `b_tile` images per grid step.

    Lane-dense layout: activation row y of an image lives at lanes x*C + c.  Scratch rows:
    [2 zero rows][img0: h data rows, 2 zero rows][img1: h data rows, 2 zero rows]... so every image
    has a zero row directly above/below its data (3x3 'same' zero padding), every data slab starts
    at an even row (bf16 packed-sublane aligned) and all stores are contiguous static windows.

    refs = (down2, skip, w_up, b_up, [w_conv_i, b_conv_i]*n_convs, out, act1, act2)
      down2 : (b_tile*h, 2*wd*cin)            bf16  parity-expanded `down` rows
      skip  : (b_tile*h, w*cs)                bf16  lane = x*cs + s
      w_up  : (2*wd*cin, w*ch)                bf16
      w_k   : (3, K_in, w*co)                 bf16  per-row-tap banded conv weights
      out   : (b_tile*h, w*co)                f32
      act1  : (2 + b_tile*(h+2), w*(ch+cs))   bf16 scratch
      act2  : (2 + b_tile*(h+2), w*co)        bf16 scratch
    """
    S = h + 2
    R = 2 + b_tile * S
    up_lanes = w * ch
    skip_lanes = w * cs
    cc_lanes = w * (ch + cs)
    co_lanes = w * co

    down_ref, skip_ref, wup_ref, bup_ref = refs[:4]
    conv_refs = refs[4:4 + 2 * n_convs]
    o_ref = refs[4 + 2 * n_convs]
    act1 = refs[4 + 2 * n_convs + 1]
    act2 = refs[4 + 2 * n_convs + 2]

    # Zero ONLY the padding rows (all data rows are fully overwritten below).  Re-done every grid
    # step so the kernel is megacore-safe under dimension_semantics=("parallel",).
    zc = jnp.zeros((2, cc_lanes), act1.dtype)
    zo = jnp.zeros((2, co_lanes), act2.dtype)
    act1[0:2, :] = zc
    act2[0:2, :] = zo
    for b in range(b_tile):
        r0 = 2 + b * S + h
        act1[r0:r0 + 2, :] = zc
        act2[r0:r0 + 2, :] = zo

    # --- ConvTranspose2d(k=2, s=2): `down` was parity-expanded along K in the wrapper, so one
    #     matmul with M = b_tile*h directly yields the upsampled rows in output-row order. ---
    yup = jnp.dot(down_ref[...], wup_ref[...], preferred_element_type=jnp.float32) + bup_ref[...]
    yup = yup.astype(act1.dtype)                           # (b_tile*h, up_lanes)
    skip_v = skip_ref[...]                                 # (b_tile*h, skip_lanes) bf16
    for b in range(b_tile):
        r = 2 + b * S
        act1[r:r + h, 0:up_lanes] = yup[b * h:(b + 1) * h, :]
        # torch.cat([up, skip], dim=channels): skip occupies the adjacent lane slab.
        act1[r:r + h, up_lanes:up_lanes + skip_lanes] = skip_v[b * h:(b + 1) * h, :]

    # --- 3x3 'same' convs + ReLU.  Each conv = three matmuls of the SAME activation slab against
    #     the three row-tap band weights; the row shift is applied to the f32 results. ---
    src = act1
    for li in range(n_convs):
        w_ref, b_ref = conv_refs[2 * li], conv_refs[2 * li + 1]
        x = src[...]                                       # (R, K) bf16, one aligned load
        z0 = jnp.dot(x, w_ref[0], preferred_element_type=jnp.float32)   # tap: row above
        z1 = jnp.dot(x, w_ref[1], preferred_element_type=jnp.float32)   # tap: same row
        z2 = jnp.dot(x, w_ref[2], preferred_element_type=jnp.float32)   # tap: row below
        z = z0[0:R - 2, :] + z1[1:R - 1, :] + z2[2:R, :] + b_ref[...]
        z = jnp.maximum(z, 0.0)                            # (R-2, co_lanes) f32
        # z[q] = conv output centred on scratch row q+1; image b row y sits at q = 1 + b*S + y.
        if li == n_convs - 1:
            # TODO(synk): emit bf16 output (out_shape dtype) if the consumer tolerates it.
            for b in range(b_tile):
                o_ref[b * h:(b + 1) * h, :] = z[1 + b * S:1 + b * S + h, :].astype(o_ref.dtype)
        else:
            zb = z.astype(act2.dtype)
            for b in range(b_tile):
                act2[2 + b * S:2 + b * S + h, :] = zb[1 + b * S:1 + b * S + h, :]
            src = act2


# --------------------- wrapper-side weight restructuring (one-time) ---------------------
def _conv_band_weight(w_oihw, width):
    """(Co, Ci, 3, 3) PyTorch conv weight -> (3, width*Ci, width*Co) per-row-tap band matrices.

    For tap dy: row = xp*Ci + ci (input column, in channel), col = x*Co + o (output column, out
    channel), entry = w[o, ci, dy, xp - x + 1] if 0 <= xp - x + 1 <= 2 else 0 (zero 'same' padding
    in x handled by the band; zero padding in y handled by the scratch pad rows).
    """
    co, ci = w_oihw.shape[:2]
    xs = jnp.arange(width)
    dx = xs[:, None] - xs[None, :] + 1                        # [xp, x]
    valid = (dx >= 0) & (dx <= 2)
    dxc = jnp.clip(dx, 0, 2)
    w_t = jnp.transpose(w_oihw, (2, 3, 1, 0))                 # [dy, dx, ci, o]
    g = w_t[:, dxc, :, :]                                     # [dy, xp, x, ci, o]
    g = jnp.where(valid[None, :, :, None, None], g, 0.0)
    g = jnp.transpose(g, (0, 1, 3, 2, 4))                     # [dy, xp, ci, x, o]
    return g.reshape(3, width * ci, width * co)


def _upsample_parity_weight(w_up, wd):
    """(Cin, Ch, 2, 2) ConvTranspose2d weight -> (2*wd*Cin, (2*wd)*Ch).

    Row = a*(wd*Cin) + j*Cin + ic (a = output-row parity), Col = (2*j+b)*Ch + c,
    entry = w_up[ic, c, a, b].  Pairs with the wrapper's parity-expanded `down` rows.
    """
    cin, chh = w_up.shape[:2]
    eye_j = jnp.eye(wd, dtype=w_up.dtype)
    t = jnp.einsum("jk,ioab->ajikbo", eye_j, w_up)            # (2, wd, cin, wd, 2, ch)
    return t.reshape(2 * wd * cin, 2 * wd * chh)


# ------------------------------------ forward wrapper ------------------------------------
def up_block_forward(params, down, skip, *, batch_tile=None):
    """down: (N, Hd, Wd, Cin) NHWC f32;  skip: (N, 2*Hd, 2*Wd, Cskip) NHWC f32."""
    N, Hd, Wd, Cin = down.shape
    Ns, H, W, Cs = skip.shape
    assert Ns == N and H == 2 * Hd and W == 2 * Wd
    up_w, up_b = params["up_w"], params["up_b"]
    Ch = up_w.shape[1]
    convs = params["convs"]
    n_convs = len(convs)
    Co = convs[0][0].shape[0]
    Cc = Ch + Cs
    bf16 = jnp.bfloat16

    # ---- batch tile: fill the MXU M dimension (~256 rows on v6e/v7x, capped by N). ----
    if batch_tile is None:
        batch_tile = max(1, min(N, max(1, 256 // H)))
    B = int(batch_tile)
    while (B * H) % 8 != 0:            # keep block sublane counts (8,*)-friendly
        B += 1
    n_steps = -(-N // B)
    Npad = n_steps * B

    # ---- one-time weight restructuring: bf16 MXU operands, f32 lane-tiled biases. ----
    wup2 = _upsample_parity_weight(up_w, Wd).astype(bf16)                # (2*Wd*Cin, W*Ch)
    bup_row = jnp.tile(up_b, W).reshape(1, W * Ch).astype(jnp.float32)
    conv_args = []
    for li, (w_c, b_c) in enumerate(convs):
        if li == 0:   # conv1 input rows are laid out as [up slab | skip slab]
            wu = _conv_band_weight(w_c[:, :Ch], W)                       # (3, W*Ch, W*Co)
            ws = _conv_band_weight(w_c[:, Ch:], W)                       # (3, W*Cs, W*Co)
            wband = jnp.concatenate([wu, ws], axis=1)                    # (3, W*Cc, W*Co)
        else:
            wband = _conv_band_weight(w_c, W)                            # (3, W*Co, W*Co)
        conv_args += [wband.astype(bf16),
                      jnp.tile(b_c, W).reshape(1, W * Co).astype(jnp.float32)]
    # TODO(synk): for large W / channel counts, column-tile the band (1-column halo) so weight VMEM
    # scales with Tx*W*Ci*Co and FLOPs approach the true 9*Ci*Co*H*W (v7x has only 64 MiB VMEM).

    # ---- lane-dense activations; `down` rows parity-expanded along K so the upsample matmul emits
    #      rows already interleaved in output-row order (no in-kernel interleave). ----
    K2 = 2 * Wd * Cin
    down_l = down.reshape(N, Hd, Wd * Cin)
    zer = jnp.zeros_like(down_l)
    down2 = jnp.stack([jnp.concatenate([down_l, zer], axis=-1),
                       jnp.concatenate([zer, down_l], axis=-1)], axis=2).reshape(N, H, K2)
    skip_l = skip.reshape(N, H, W * Cs)
    if Npad != N:
        pad = Npad - N
        down2 = jnp.concatenate([down2, jnp.zeros((pad, H, K2), down2.dtype)], axis=0)
        skip_l = jnp.concatenate([skip_l, jnp.zeros((pad, H, W * Cs), skip_l.dtype)], axis=0)
    down2 = down2.reshape(Npad * H, K2).astype(bf16)
    skip_l = skip_l.reshape(Npad * H, W * Cs).astype(bf16)

    kern = functools.partial(_upblock_kernel, n_convs=n_convs, b_tile=B,
                             h=H, w=W, ch=Ch, cs=Cs, co=Co)
    in_specs = [
        pl.BlockSpec((B * H, K2), lambda g: (g, 0)),
        pl.BlockSpec((B * H, W * Cs), lambda g: (g, 0)),
        pl.BlockSpec((K2, W * Ch), lambda g: (0, 0)),
        pl.BlockSpec((1, W * Ch), lambda g: (0, 0)),
    ]
    for li in range(n_convs):
        cin_lanes = W * Cc if li == 0 else W * Co
        in_specs += [pl.BlockSpec((3, cin_lanes, W * Co), lambda g: (0, 0, 0)),
                     pl.BlockSpec((1, W * Co), lambda g: (0, 0))]
    # TODO(synk): mark the grid-invariant weight/bias specs pipeline_mode=pl.Buffered(1) to halve
    # their VMEM footprint on v7x once that path is verified on the deployed JAX version.

    R = 2 + B * (H + 2)
    out = pl.pallas_call(
        kern,
        out_shape=jax.ShapeDtypeStruct((Npad * H, W * Co), jnp.float32),
        grid=(Npad // B,),
        in_specs=in_specs,
        out_specs=pl.BlockSpec((B * H, W * Co), lambda g: (g, 0)),
        scratch_shapes=[pltpu.VMEM((R, W * Cc), bf16),
                        pltpu.VMEM((R, W * Co), bf16)],
        compiler_params=pltpu.CompilerParams(
            dimension_semantics=("parallel",),
            vmem_limit_bytes=32 * 1024 * 1024),
    )(down2, skip_l, wup2, bup_row, *conv_args)
    return out.reshape(Npad, H, W, Co)[:N]


# ----------------------------- pure-JAX reference --------------------------
def ref_forward(params, down, skip):
    w, b = params["up_w"], params["up_b"]
    y = jnp.einsum("nhwc,coab->nhawbo", down, w)     # [n, h, a, w, b, oc]
    N, Hh, _, Ww, _, Chh = y.shape
    y = y.reshape(N, 2 * Hh, 2 * Ww, Chh) + b
    x = jnp.concatenate([y, skip], axis=-1)
    for (cw, cb) in params["convs"]:
        x = jax.lax.conv_general_dilated(
            x, jnp.transpose(cw, (2, 3, 1, 0)), (1, 1), "SAME",
            dimension_numbers=("NHWC", "HWIO", "NHWC"))
        x = jnp.maximum(x + cb, 0.0)
    return x


# --------------------------------- main ------------------------------------
def _make_params(key, cin, cskip, cout, conv_type):
    ch = cin // 2
    n_convs = 2 if conv_type == "double" else 3
    ks = jax.random.split(key, 2 + n_convs)
    params = {
        "up_w": 0.1 * jax.random.normal(ks[0], (cin, ch, 2, 2), jnp.float32),
        "up_b": 0.1 * jax.random.normal(ks[1], (ch,), jnp.float32),
    }
    chans = [ch + cskip] + [cout] * n_convs
    convs = []
    for li in range(n_convs):
        wk, bk = jax.random.split(ks[2 + li])
        convs.append((0.1 * jax.random.normal(wk, (chans[li + 1], chans[li], 3, 3), jnp.float32),
                      0.1 * jax.random.normal(bk, (chans[li + 1],), jnp.float32)))
    params["convs"] = convs
    return params


if __name__ == "__main__":
    key = jax.random.PRNGKey(0)
    # Config 1: UpBlock(8, 4, 8, 'double'); Config 2 (larger, triple conv, uneven batch) addresses
    # the review's request to validate a bigger configuration against the reference.
    configs = [
        dict(name="double_small", N=2, Cin=8, Cskip=4, Cout=8, Hd=8, Wd=8,
             conv_type="double", batch_tile=None, tol=7.5e-2),
        dict(name="triple_bigger", N=3, Cin=16, Cskip=8, Cout=16, Hd=16, Wd=16,
             conv_type="triple", batch_tile=2, tol=1e-1),
    ]
    for idx, cfg in enumerate(configs):
        k = jax.random.fold_in(key, idx)
        kp, kd, ksk = jax.random.split(k, 3)
        params = _make_params(kp, cfg["Cin"], cfg["Cskip"], cfg["Cout"], cfg["conv_type"])
        # Inputs are channels-last (a PyTorch NCHW tensor would be transposed at this boundary).
        down = jax.random.normal(kd, (cfg["N"], cfg["Hd"], cfg["Wd"], cfg["Cin"]), jnp.float32)
        skip = jax.random.normal(ksk, (cfg["N"], 2 * cfg["Hd"], 2 * cfg["Wd"], cfg["Cskip"]),
                                 jnp.float32)

        out = jax.block_until_ready(
            up_block_forward(params, down, skip, batch_tile=cfg["batch_tile"]))
        ref = jax.block_until_ready(ref_forward(params, down, skip))
        assert out.shape == ref.shape, (cfg["name"], out.shape, ref.shape)
        max_err = float(jnp.max(jnp.abs(out - ref)))
        # bf16 MXU operands / bf16 intermediate activations vs. f32 reference.
        assert jnp.allclose(out, ref, atol=cfg["tol"], rtol=cfg["tol"]), (cfg["name"], max_err)

    print("KERNEL_OK")
</pallas_src>

<mosaic_0001>
module attributes {stable_mosaic.version = 11 : i64} {
  func.func @_upblock_kernel(%arg0: i32, %arg1: memref<32x128xbf16, #tpu.memory_space<vmem>>, %arg2: memref<32x64xbf16, #tpu.memory_space<vmem>>, %arg3: memref<128x64xbf16, #tpu.memory_space<vmem>>, %arg4: memref<1x64xf32, #tpu.memory_space<vmem>>, %arg5: memref<3x128x128xbf16, #tpu.memory_space<vmem>>, %arg6: memref<1x128xf32, #tpu.memory_space<vmem>>, %arg7: memref<3x128x128xbf16, #tpu.memory_space<vmem>>, %arg8: memref<1x128xf32, #tpu.memory_space<vmem>>, %arg9: memref<32x128xf32, #tpu.memory_space<vmem>>, %arg10: memref<38x128xbf16, #tpu.memory_space<vmem>>, %arg11: memref<38x128xbf16, #tpu.memory_space<vmem>>) attributes {dimension_semantics = [#tpu.dimension_semantics<parallel>], iteration_bounds = array<i64: 1>, scalar_prefetch = 0 : i64, scratch_operands = 2 : i64, tpu.core_type = #tpu.core_type<tc>, window_params = [{transform_indices = @transform_0, window_bounds = array<i64: 32, 128>}, {transform_indices = @transform_1, window_bounds = array<i64: 32, 64>}, {pipeline_mode = #tpu.pipeline_mode<synchronous>, transform_indices = @transform_2, window_bounds = array<i64: 128, 64>}, {pipeline_mode = #tpu.pipeline_mode<synchronous>, transform_indices = @transform_3, window_bounds = array<i64: 1, 64>}, {pipeline_mode = #tpu.pipeline_mode<synchronous>, transform_indices = @transform_4, window_bounds = array<i64: 3, 128, 128>}, {pipeline_mode = #tpu.pipeline_mode<synchronous>, transform_indices = @transform_5, window_bounds = array<i64: 1, 128>}, {pipeline_mode = #tpu.pipeline_mode<synchronous>, transform_indices = @transform_6, window_bounds = array<i64: 3, 128, 128>}, {pipeline_mode = #tpu.pipeline_mode<synchronous>, transform_indices = @transform_7, window_bounds = array<i64: 1, 128>}, {transform_indices = @transform_8, window_bounds = array<i64: 32, 128>}]} {
    %cst = arith.constant 0.000000e+00 : bf16
    %0 = vector.broadcast %cst : bf16 to vector<2x128xbf16>
    %cst_0 = arith.constant 0.000000e+00 : bf16
    %1 = vector.broadcast %cst_0 : bf16 to vector<2x128xbf16>
    %c0 = arith.constant 0 : index
    %c0_1 = arith.constant 0 : index
    %2 = vector.load %arg10[%c0, %c0_1] : memref<38x128xbf16, #tpu.memory_space<vmem>>, vector<2x128xbf16>
    tpu.vector_store %arg10[%c0, %c0_1], %0 {strides = array<i32>} : memref<38x128xbf16, #tpu.memory_space<vmem>>, vector<2x128xbf16>,
    %c0_2 = arith.constant 0 : index
    %c0_3 = arith.constant 0 : index
    %3 = vector.load %arg11[%c0_2, %c0_3] : memref<38x128xbf16, #tpu.memory_space<vmem>>, vector<2x128xbf16>
    tpu.vector_store %arg11[%c0_2, %c0_3], %1 {strides = array<i32>} : memref<38x128xbf16, #tpu.memory_space<vmem>>, vector<2x128xbf16>,
    %c18 = arith.constant 18 : index
    %c0_4 = arith.constant 0 : index
    %4 = vector.load %arg10[%c18, %c0_4] : memref<38x128xbf16, #tpu.memory_space<vmem>>, vector<2x128xbf16>
    tpu.vector_store %arg10[%c18, %c0_4], %0 {strides = array<i32>} : memref<38x128xbf16, #tpu.memory_space<vmem>>, vector<2x128xbf16>,
    %c18_5 = arith.constant 18 : index
    %c0_6 = arith.constant 0 : index
    %5 = vector.load %arg11[%c18_5, %c0_6] : memref<38x128xbf16, #tpu.memory_space<vmem>>, vector<2x128xbf16>
    tpu.vector_store %arg11[%c18_5, %c0_6], %1 {strides = array<i32>} : memref<38x128xbf16, #tpu.memory_space<vmem>>, vector<2x128xbf16>,
    %c36 = arith.constant 36 : index
    %c0_7 = arith.constant 0 : index
    %6 = vector.load %arg10[%c36, %c0_7] : memref<38x128xbf16, #tpu.memory_space<vmem>>, vector<2x128xbf16>
    tpu.vector_store %arg10[%c36, %c0_7], %0 {strides = array<i32>} : memref<38x128xbf16, #tpu.memory_space<vmem>>, vector<2x128xbf16>,
    %c36_8 = arith.constant 36 : index
    %c0_9 = arith.constant 0 : index
    %7 = vector.load %arg11[%c36_8, %c0_9] : memref<38x128xbf16, #tpu.memory_space<vmem>>, vector<2x128xbf16>
    tpu.vector_store %arg11[%c36_8, %c0_9], %1 {strides = array<i32>} : memref<38x128xbf16, #tpu.memory_space<vmem>>, vector<2x128xbf16>,
    %c0_10 = arith.constant 0 : index
    %c0_11 = arith.constant 0 : index
    %8 = vector.load %arg1[%c0_10, %c0_11] : memref<32x128xbf16, #tpu.memory_space<vmem>>, vector<32x128xbf16>
    %c0_12 = arith.constant 0 : index
    %c0_13 = arith.constant 0 : index
    %9 = vector.load %arg3[%c0_12, %c0_13] : memref<128x64xbf16, #tpu.memory_space<vmem>>, vector<128x64xbf16>
    %cst_14 = arith.constant dense<0.000000e+00> : vector<32x64xf32>
    %10 = tpu.matmul %8, %9, %cst_14 {dimension_numbers = #tpu.dot_dimension_numbers<[1], [0], [0], [1], [0, 0, 1, 1], [], []>} : vector<32x128xbf16>, vector<128x64xbf16>, vector<32x64xf32> -> vector<32x64xf32>
    %c0_15 = arith.constant 0 : index
    %c0_16 = arith.constant 0 : index
    %11 = vector.load %arg4[%c0_15, %c0_16] : memref<1x64xf32, #tpu.memory_space<vmem>>, vector<1x64xf32>
    %12 = vector.broadcast %11 : vector<1x64xf32> to vector<32x64xf32>
    %13 = arith.addf %10, %12 : vector<32x64xf32>
    %14 = arith.truncf %13 : vector<32x64xf32> to vector<32x64xbf16>
    %c0_17 = arith.constant 0 : index
    %c0_18 = arith.constant 0 : index
    %15 = vector.load %arg2[%c0_17, %c0_18] : memref<32x64xbf16, #tpu.memory_space<vmem>>, vector<32x64xbf16>
    %16 = vector.extract_strided_slice %14 {offsets = [0, 0], sizes = [16, 64], strides = [1, 1]} : vector<32x64xbf16> to vector<16x64xbf16>
    %c2 = arith.constant 2 : index
    %c0_19 = arith.constant 0 : index
    %17 = vector.load %arg10[%c2, %c0_19] : memref<38x128xbf16, #tpu.memory_space<vmem>>, vector<16x64xbf16>
    tpu.vector_store %arg10[%c2, %c0_19], %16 {strides = array<i32>} : memref<38x128xbf16, #tpu.memory_space<vmem>>, vector<16x64xbf16>,
    %18 = vector.extract_strided_slice %15 {offsets = [0, 0], sizes = [16, 64], strides = [1, 1]} : vector<32x64xbf16> to vector<16x64xbf16>
    %c2_20 = arith.constant 2 : index
    %c64 = arith.constant 64 : index
    %19 = vector.load %arg10[%c2_20, %c64] : memref<38x128xbf16, #tpu.memory_space<vmem>>, vector<16x64xbf16>
    tpu.vector_store %arg10[%c2_20, %c64], %18 {strides = array<i32>} : memref<38x128xbf16, #tpu.memory_space<vmem>>, vector<16x64xbf16>,
    %20 = vector.extract_strided_slice %14 {offsets = [16, 0], sizes = [16, 64], strides = [1, 1]} : vector<32x64xbf16> to vector<16x64xbf16>
    %c20 = arith.constant 20 : index
    %c0_21 = arith.constant 0 : index
    %21 = vector.load %arg10[%c20, %c0_21] : memref<38x128xbf16, #tpu.memory_space<vmem>>, vector<16x64xbf16>
    tpu.vector_store %arg10[%c20, %c0_21], %20 {strides = array<i32>} : memref<38x128xbf16, #tpu.memory_space<vmem>>, vector<16x64xbf16>,
    %22 = vector.extract_strided_slice %15 {offsets = [16, 0], sizes = [16, 64], strides = [1, 1]} : vector<32x64xbf16> to vector<16x64xbf16>
    %c20_22 = arith.constant 20 : index
    %c64_23 = arith.constant 64 : index
    %23 = vector.load %arg10[%c20_22, %c64_23] : memref<38x128xbf16, #tpu.memory_space<vmem>>, vector<16x64xbf16>
    tpu.vector_store %arg10[%c20_22, %c64_23], %22 {strides = array<i32>} : memref<38x128xbf16, #tpu.memory_space<vmem>>, vector<16x64xbf16>,
    %c0_24 = arith.constant 0 : index
    %c0_25 = arith.constant 0 : index
    %24 = vector.load %arg10[%c0_24, %c0_25] : memref<38x128xbf16, #tpu.memory_space<vmem>>, vector<38x128xbf16>
    %c0_26 = arith.constant 0 : index
    %c0_27 = arith.constant 0 : index
    %c0_28 = arith.constant 0 : index
    %25 = vector.load %arg5[%c0_26, %c0_27, %c0_28] : memref<3x128x128xbf16, #tpu.memory_space<vmem>>, vector<1x128x128xbf16>
    %26 = vector.shape_cast %25 : vector<1x128x128xbf16> to vector<128x128xbf16>
    %cst_29 = arith.constant dense<0.000000e+00> : vector<38x128xf32>
    %27 = tpu.matmul %24, %26, %cst_29 {dimension_numbers = #tpu.dot_dimension_numbers<[1], [0], [0], [1], [0, 0, 1, 1], [], []>} : vector<38x128xbf16>, vector<128x128xbf16>, vector<38x128xf32> -> vector<38x128xf32>
    %c1 = arith.constant 1 : index
    %c0_30 = arith.constant 0 : index
    %c0_31 = arith.constant 0 : index
    %28 = vector.load %arg5[%c1, %c0_30, %c0_31] : memref<3x128x128xbf16, #tpu.memory_space<vmem>>, vector<1x128x128xbf16>
    %29 = vector.shape_cast %28 : vector<1x128x128xbf16> to vector<128x128xbf16>
    %cst_32 = arith.constant dense<0.000000e+00> : vector<38x128xf32>
    %30 = tpu.matmul %24, %29, %cst_32 {dimension_numbers = #tpu.dot_dimension_numbers<[1], [0], [0], [1], [0, 0, 1, 1], [], []>} : vector<38x128xbf16>, vector<128x128xbf16>, vector<38x128xf32> -> vector<38x128xf32>
    %c2_33 = arith.constant 2 : index
    %c0_34 = arith.constant 0 : index
    %c0_35 = arith.constant 0 : index
    %31 = vector.load %arg5[%c2_33, %c0_34, %c0_35] : memref<3x128x128xbf16, #tpu.memory_space<vmem>>, vector<1x128x128xbf16>
    %32 = vector.shape_cast %31 : vector<1x128x128xbf16> to vector<128x128xbf16>
    %cst_36 = arith.constant dense<0.000000e+00> : vector<38x128xf32>
    %33 = tpu.matmul %24, %32, %cst_36 {dimension_numbers = #tpu.dot_dimension_numbers<[1], [0], [0], [1], [0, 0, 1, 1], [], []>} : vector<38x128xbf16>, vector<128x128xbf16>, vector<38x128xf32> -> vector<38x128xf32>
    %34 = vector.extract_strided_slice %27 {offsets = [0, 0], sizes = [36, 128], strides = [1, 1]} : vector<38x128xf32> to vector<36x128xf32>
    %35 = vector.extract_strided_slice %30 {offsets = [1, 0], sizes = [36, 128], strides = [1, 1]} : vector<38x128xf32> to vector<36x128xf32>
    %36 = arith.addf %34, %35 : vector<36x128xf32>
    %37 = vector.extract_strided_slice %33 {offsets = [2, 0], sizes = [36, 128], strides = [1, 1]} : vector<38x128xf32> to vector<36x128xf32>
    %38 = arith.addf %36, %37 : vector<36x128xf32>
    %c0_37 = arith.constant 0 : index
    %c0_38 = arith.constant 0 : index
    %39 = vector.load %arg6[%c0_37, %c0_38] : memref<1x128xf32, #tpu.memory_space<vmem>>, vector<1x128xf32>
    %40 = vector.broadcast %39 : vector<1x128xf32> to vector<36x128xf32>
    %41 = arith.addf %38, %40 : vector<36x128xf32>
    %cst_39 = arith.constant 0.000000e+00 : f32
    %42 = vector.broadcast %cst_39 : f32 to vector<36x128xf32>
    %43 = arith.maximumf %41, %42 : vector<36x128xf32>
    %44 = arith.truncf %43 : vector<36x128xf32> to vector<36x128xbf16>
    %45 = vector.extract_strided_slice %44 {offsets = [1, 0], sizes = [16, 128], strides = [1, 1]} : vector<36x128xbf16> to vector<16x128xbf16>
    %c2_40 = arith.constant 2 : index
    %c0_41 = arith.constant 0 : index
    %46 = vector.load %arg11[%c2_40, %c0_41] : memref<38x128xbf16, #tpu.memory_space<vmem>>, vector<16x128xbf16>
    tpu.vector_store %arg11[%c2_40, %c0_41], %45 {strides = array<i32>} : memref<38x128xbf16, #tpu.memory_space<vmem>>, vector<16x128xbf16>,
    %47 = vector.extract_strided_slice %44 {offsets = [19, 0], sizes = [16, 128], strides = [1, 1]} : vector<36x128xbf16> to vector<16x128xbf16>
    %c20_42 = arith.constant 20 : index
    %c0_43 = arith.constant 0 : index
    %48 = vector.load %arg11[%c20_42, %c0_43] : memref<38x128xbf16, #tpu.memory_space<vmem>>, vector<16x128xbf16>
    tpu.vector_store %arg11[%c20_42, %c0_43], %47 {strides = array<i32>} : memref<38x128xbf16, #tpu.memory_space<vmem>>, vector<16x128xbf16>,
    %c0_44 = arith.constant 0 : index
    %c0_45 = arith.constant 0 : index
    %49 = vector.load %arg11[%c0_44, %c0_45] : memref<38x128xbf16, #tpu.memory_space<vmem>>, vector<38x128xbf16>
    %c0_46 = arith.constant 0 : index
    %c0_47 = arith.constant 0 : index
    %c0_48 = arith.constant 0 : index
    %50 = vector.load %arg7[%c0_46, %c0_47, %c0_48] : memref<3x128x128xbf16, #tpu.memory_space<vmem>>, vector<1x128x128xbf16>
    %51 = vector.shape_cast %50 : vector<1x128x128xbf16> to vector<128x128xbf16>
    %cst_49 = arith.constant dense<0.000000e+00> : vector<38x128xf32>
    %52 = tpu.matmul %49, %51, %cst_49 {dimension_numbers = #tpu.dot_dimension_numbers<[1], [0], [0], [1], [0, 0, 1, 1], [], []>} : vector<38x128xbf16>, vector<128x128xbf16>, vector<38x128xf32> -> vector<38x128xf32>
    %c1_50 = arith.constant 1 : index
    %c0_51 = arith.constant 0 : index
    %c0_52 = arith.constant 0 : index
    %53 = vector.load %arg7[%c1_50, %c0_51, %c0_52] : memref<3x128x128xbf16, #tpu.memory_space<vmem>>, vector<1x128x128xbf16>
    %54 = vector.shape_cast %53 : vector<1x128x128xbf16> to vector<128x128xbf16>
    %cst_53 = arith.constant dense<0.000000e+00> : vector<38x128xf32>
    %55 = tpu.matmul %49, %54, %cst_53 {dimension_numbers = #tpu.dot_dimension_numbers<[1], [0], [0], [1], [0, 0, 1, 1], [], []>} : vector<38x128xbf16>, vector<128x128xbf16>, vector<38x128xf32> -> vector<38x128xf32>
    %c2_54 = arith.constant 2 : index
    %c0_55 = arith.constant 0 : index
    %c0_56 = arith.constant 0 : index
    %56 = vector.load %arg7[%c2_54, %c0_55, %c0_56] : memref<3x128x128xbf16, #tpu.memory_space<vmem>>, vector<1x128x128xbf16>
    %57 = vector.shape_cast %56 : vector<1x128x128xbf16> to vector<128x128xbf16>
    %cst_57 = arith.constant dense<0.000000e+00> : vector<38x128xf32>
    %58 = tpu.matmul %49, %57, %cst_57 {dimension_numbers = #tpu.dot_dimension_numbers<[1], [0], [0], [1], [0, 0, 1, 1], [], []>} : vector<38x128xbf16>, vector<128x128xbf16>, vector<38x128xf32> -> vector<38x128xf32>
    %59 = vector.extract_strided_slice %52 {offsets = [0, 0], sizes = [36, 128], strides = [1, 1]} : vector<38x128xf32> to vector<36x128xf32>
    %60 = vector.extract_strided_slice %55 {offsets = [1, 0], sizes = [36, 128], strides = [1, 1]} : vector<38x128xf32> to vector<36x128xf32>
    %61 = arith.addf %59, %60 : vector<36x128xf32>
    %62 = vector.extract_strided_slice %58 {offsets = [2, 0], sizes = [36, 128], strides = [1, 1]} : vector<38x128xf32> to vector<36x128xf32>
    %63 = arith.addf %61, %62 : vector<36x128xf32>
    %c0_58 = arith.constant 0 : index
    %c0_59 = arith.constant 0 : index
    %64 = vector.load %arg8[%c0_58, %c0_59] : memref<1x128xf32, #tpu.memory_space<vmem>>, vector<1x128xf32>
    %65 = vector.broadcast %64 : vector<1x128xf32> to vector<36x128xf32>
    %66 = arith.addf %63, %65 : vector<36x128xf32>
    %cst_60 = arith.constant 0.000000e+00 : f32
    %67 = vector.broadcast %cst_60 : f32 to vector<36x128xf32>
    %68 = arith.maximumf %66, %67 : vector<36x128xf32>
    %69 = vector.extract_strided_slice %68 {offsets = [1, 0], sizes = [16, 128], strides = [1, 1]} : vector<36x128xf32> to vector<16x128xf32>
    %c0_61 = arith.constant 0 : index
    %c0_62 = arith.constant 0 : index
    %70 = vector.load %arg9[%c0_61, %c0_62] : memref<32x128xf32, #tpu.memory_space<vmem>>, vector<16x128xf32>
    tpu.vector_store %arg9[%c0_61, %c0_62], %69 {strides = array<i32>} : memref<32x128xf32, #tpu.memory_space<vmem>>, vector<16x128xf32>,
    %71 = vector.extract_strided_slice %68 {offsets = [19, 0], sizes = [16, 128], strides = [1, 1]} : vector<36x128xf32> to vector<16x128xf32>
    %c16 = arith.constant 16 : index
    %c0_63 = arith.constant 0 : index
    %72 = vector.load %arg9[%c16, %c0_63] : memref<32x128xf32, #tpu.memory_space<vmem>>, vector<16x128xf32>
    tpu.vector_store %arg9[%c16, %c0_63], %71 {strides = array<i32>} : memref<32x128xf32, #tpu.memory_space<vmem>>, vector<16x128xf32>,
    return
  }
  func.func @transform_0(%arg0: i32) -> (i32, i32) {
    %c0_i32 = arith.constant 0 : i32
    %c0_i32_0 = arith.constant 0 : i32
    return %arg0, %c0_i32 : i32, i32
  }
  func.func @transform_1(%arg0: i32) -> (i32, i32) {
    %c0_i32 = arith.constant 0 : i32
    %c0_i32_0 = arith.constant 0 : i32
    return %arg0, %c0_i32 : i32, i32
  }
  func.func @transform_2(%arg0: i32) -> (i32, i32) {
    %c0_i32 = arith.constant 0 : i32
    %c0_i32_0 = arith.constant 0 : i32
    %c0_i32_1 = arith.constant 0 : i32
    return %c0_i32, %c0_i32_0 : i32, i32
  }
  func.func @transform_3(%arg0: i32) -> (i32, i32) {
    %c0_i32 = arith.constant 0 : i32
    %c0_i32_0 = arith.constant 0 : i32
    %c0_i32_1 = arith.constant 0 : i32
    return %c0_i32, %c0_i32_0 : i32, i32
  }
  func.func @transform_4(%arg0: i32) -> (i32, i32, i32) {
    %c0_i32 = arith.constant 0 : i32
    %c0_i32_0 = arith.constant 0 : i32
    %c0_i32_1 = arith.constant 0 : i32
    %c0_i32_2 = arith.constant 0 : i32
    return %c0_i32, %c0_i32_0, %c0_i32_1 : i32, i32, i32
  }
  func.func @transform_5(%arg0: i32) -> (i32, i32) {
    %c0_i32 = arith.constant 0 : i32
    %c0_i32_0 = arith.constant 0 : i32
    %c0_i32_1 = arith.constant 0 : i32
    return %c0_i32, %c0_i32_0 : i32, i32
  }
  func.func @transform_6(%arg0: i32) -> (i32, i32, i32) {
    %c0_i32 = arith.constant 0 : i32
    %c0_i32_0 = arith.constant 0 : i32
    %c0_i32_1 = arith.constant 0 : i32
    %c0_i32_2 = arith.constant 0 : i32
    return %c0_i32, %c0_i32_0, %c0_i32_1 : i32, i32, i32
  }
  func.func @transform_7(%arg0: i32) -> (i32, i32) {
    %c0_i32 = arith.constant 0 : i32
    %c0_i32_0 = arith.constant 0 : i32
    %c0_i32_1 = arith.constant 0 : i32
    return %c0_i32, %c0_i32_0 : i32, i32
  }
  func.func @transform_8(%arg0: i32) -> (i32, i32) {
    %c0_i32 = arith.constant 0 : i32
    %c0_i32_0 = arith.constant 0 : i32
    return %arg0, %c0_i32 : i32, i32
  }
}

</mosaic_0001>

<llo_original>
// kernel: tpu_custom_call.1
$region0: #{tpu_custom_call.1}
  #allocation0 [shape = 'u32[]', space=smem, size = 0x4, offset = 0x4, fixed_abs, tag = 'smem constant byte address 0x4 - core index']
  #allocation1 [shape = 'u32[144,128]{1,0:T(1,128)}', space=vmem, size = 0x12000, scoped, tag = 'internal scratch']
  #allocation2 [shape = 'bf16[38,128]{1,0:T(8,128)(2,1)}', space=vmem, size = 0x2800, scoped, tag = 'scratch operand']
  #allocation3 [shape = 'bf16[38,128]{1,0:T(8,128)(2,1)}', space=vmem, size = 0x2800, scoped, tag = 'scratch operand']
  %s0 = inlined_call_operand.vmem [shape: bf16[32,128], index: 0, kind: input, shape index: {}]
  %s1 = inlined_call_operand.vmem [shape: bf16[32,64], index: 1, kind: input, shape index: {}]
  %s2 = inlined_call_operand.vmem [shape: bf16[128,64], index: 2, kind: input, shape index: {}]
  %s3 = inlined_call_operand.vmem [shape: f32[1,64], index: 3, kind: input, shape index: {}]
  %s4 = inlined_call_operand.hbm [shape: bf16[3,128,128], index: 4, kind: input, shape index: {}]
  %s5 = inlined_call_operand.vmem [shape: f32[1,128], index: 5, kind: input, shape index: {}]
  %s6 = inlined_call_operand.hbm [shape: bf16[3,128,128], index: 6, kind: input, shape index: {}]
  %s7 = inlined_call_operand.vmem [shape: f32[1,128], index: 7, kind: input, shape index: {}]
  %s8 = inlined_call_operand.hbm [shape: f32[32,128], index: 8, kind: output, shape index: {}]
  %s9 = sld [smem:[#allocation0]]
  $region50: #{tpu_custom_call.1} parent=0
    _
  %s11 = ssub.s32 1, %s9
  %s12 = scalar_select 0, %s11, %s9
  $region1: #{tpu_custom_call.1} parent=0
    #allocation4 [shape = 'u8[98304]{0}', space=vmem, size = 0x18000, scoped, tag = 'input window, operand 4, single buffered']
    #allocation5 [shape = 's32[1]{0}', space=sflag, size = 0x4, scoped, tag = 'scoped memory for tpu_custom_call.1']
    #allocation6 [shape = 's32[1]{0}', space=sflag, size = 0x4, scoped, tag = 'scoped memory for tpu_custom_call.1']
    #allocation7 [shape = 'u8[98304]{0}', space=vmem, size = 0x18000, scoped, tag = 'input window, operand 6, single buffered']
    #allocation8 [shape = 's32[1]{0}', space=sflag, size = 0x4, scoped, tag = 'scoped memory for tpu_custom_call.1']
    #allocation9 [shape = 'u8[16384]{0}', space=vmem, size = 0x4000, scoped, tag = 'output window, operand 0, single buffered']
    %13 = vsyncpa [#allocation5], 0
    %14 = vsyncpa [#allocation8], 0
    %15 = vsyncpa [#allocation6], 0
    // Predicated region
    $region2: #{tpu_custom_call.1} parent=1 // pred_check
      _
    $region3: #{tpu_custom_call.1} parent=1 // pred_check_branch
      %17 = sbr.rel (0) target = $region5
    $region4: #{tpu_custom_call.1} parent=1 // pred_region
      _
    $region5: #{tpu_custom_call.1} parent=1 // pred_fallthru
      _
    // Predicated region
    $region6: #{tpu_custom_call.1} parent=1 // pred_check
      _
    $region7: #{tpu_custom_call.1} parent=1 // pred_check_branch
      %19 = sbr.rel (0) target = $region9
    $region8: #{tpu_custom_call.1} parent=1 // pred_region
      _
    $region9: #{tpu_custom_call.1} parent=1 // pred_fallthru
      _
    // Predicated region
    $region10: #{tpu_custom_call.1} parent=1 // pred_check
      _
    $region11: #{tpu_custom_call.1} parent=1 // pred_check_branch
      %21 = sbr.rel (0) target = $region13
    $region12: #{tpu_custom_call.1} parent=1 // pred_region
      _
    $region13: #{tpu_custom_call.1} parent=1 // pred_fallthru
      _
    // Predicated region
    $region14: #{tpu_custom_call.1} parent=1 // pred_check
      _
    $region15: #{tpu_custom_call.1} parent=1 // pred_check_branch
      %23 = sbr.rel (0) target = $region17
    $region16: #{tpu_custom_call.1} parent=1 // pred_region
      _
    $region17: #{tpu_custom_call.1} parent=1 // pred_fallthru
      _
    // Predicated region
    $region18: #{tpu_custom_call.1} parent=1 // pred_check
      _
    $region19: #{tpu_custom_call.1} parent=1 // pred_check_branch
      %25 = sbr.rel (0) target = $region21
    $region20: #{tpu_custom_call.1} parent=1 // pred_region
      %s27 = ssub.s32 3072, 3072
      %28 = vsyncadd [#allocation5], %s27
      %s29 = sshll.u32 [#allocation4], 4
      %s30 = int_to_ptr.vmem [resolvable:$true] %s29
      %35 = dma.hbm_to_vmem [thread:$0]  %s4, 3072, %s30, [#allocation5], 64, 64, 4
    $region21: #{tpu_custom_call.1} parent=1 // pred_fallthru
      _
    // Predicated region
    $region22: #{tpu_custom_call.1} parent=1 // pred_check
      _
    $region23: #{tpu_custom_call.1} parent=1 // pred_check_branch
      %37 = sbr.rel (0) target = $region25
    $region24: #{tpu_custom_call.1} parent=1 // pred_region
      _
    $region25: #{tpu_custom_call.1} parent=1 // pred_fallthru
      _
    // Predicated region
    $region26: #{tpu_custom_call.1} parent=1 // pred_check
      _
    $region27: #{tpu_custom_call.1} parent=1 // pred_check_branch
      %39 = sbr.rel (0) target = $region29
    $region28: #{tpu_custom_call.1} parent=1 // pred_region
      %s41 = ssub.s32 3072, 3072
      %42 = vsyncadd [#allocation8], %s41
      %s43 = sshll.u32 [#allocation7], 4
      %s44 = int_to_ptr.vmem [resolvable:$true] %s43
      %49 = dma.hbm_to_vmem [thread:$0]  %s6, 3072, %s44, [#allocation8], 64, 64, 4
    $region29: #{tpu_custom_call.1} parent=1 // pred_fallthru
      _
    // Predicated region
    $region30: #{tpu_custom_call.1} parent=1 // pred_check
      _
    $region31: #{tpu_custom_call.1} parent=1 // pred_check_branch
      %51 = sbr.rel (0) target = $region33
    $region32: #{tpu_custom_call.1} parent=1 // pred_region
      _
    $region33: #{tpu_custom_call.1} parent=1 // pred_fallthru
      _
    // Predicated region
    $region34: #{tpu_custom_call.1} parent=1 // pred_check
      _
    $region35: #{tpu_custom_call.1} parent=1 // pred_check_branch
      %53 = sbr.rel (0) target = $region37
    $region36: #{tpu_custom_call.1} parent=1 // pred_region
      %54 = dma.done [#allocation5], 3072
    $region37: #{tpu_custom_call.1} parent=1 // pred_fallthru
      _
    // Predicated region
    $region38: #{tpu_custom_call.1} parent=1 // pred_check
      _
    $region39: #{tpu_custom_call.1} parent=1 // pred_check_branch
      %56 = sbr.rel (0) target = $region41
    $region40: #{tpu_custom_call.1} parent=1 // pred_region
      %57 = dma.done [#allocation8], 3072
    $region41: #{tpu_custom_call.1} parent=1 // pred_fallthru
      _
    %59 = vst [vmem:[#allocation2] sm:$0x1] 0
    %60 = vst [vmem:[#allocation3] sm:$0x1] 0
    %61 = vst [vmem:[#allocation2 + $0x8] sm:$0x2] 0
    %62 = vst [vmem:[#allocation3 + $0x8] sm:$0x2] 0
    %63 = vst [vmem:[#allocation2 + $0x10] sm:$0x4] 0
    %64 = vst [vmem:[#allocation3 + $0x10] sm:$0x4] 0
    %v65 = vld [vmem:[%s0] sm:$0xf]
    %v66 = vld [vmem:[%s0 + $0x4] sm:$0xf]
    %v67 = vld [vmem:[%s0 + $0x8] sm:$0xf]
    %v68 = vld [vmem:[%s0 + $0xc] sm:$0xf]
    %v69 = vld [vmem:[%s2] sm:$0xf]
    %v70 = vld [vmem:[%s2 + $0x4] sm:$0xf]
    %v71 = vld [vmem:[%s2 + $0x8] sm:$0xf]
    %v72 = vld [vmem:[%s2 + $0xc] sm:$0xf]
    %v73 = vld [vmem:[%s2 + $0x10] sm:$0xf]
    %v74 = vld [vmem:[%s2 + $0x14] sm:$0xf]
    %v75 = vld [vmem:[%s2 + $0x18] sm:$0xf]
    %v76 = vld [vmem:[%s2 + $0x1c] sm:$0xf]
    %v77 = vld [vmem:[%s2 + $0x20] sm:$0xf]
    %v78 = vld [vmem:[%s2 + $0x24] sm:$0xf]
    %v79 = vld [vmem:[%s2 + $0x28] sm:$0xf]
    %v80 = vld [vmem:[%s2 + $0x2c] sm:$0xf]
    %v81 = vld [vmem:[%s2 + $0x30] sm:$0xf]
    %v82 = vld [vmem:[%s2 + $0x34] sm:$0xf]
    %v83 = vld [vmem:[%s2 + $0x38] sm:$0xf]
    %v84 = vld [vmem:[%s2 + $0x3c] sm:$0xf]
    %v85 = vld [vmem:[%s3] sm:$0x1]
    %v87 = vlaneseq
    %v88 = vshrl.u32 %v87, 7
    %v89 = vsub.s32 0, %v88
    %v90 = vrot.slane %v85, %v89
    %v96 = vunpack.c.l.b16 %v65
    %v97 = vunpack.c.l.b16 %v66
    %v98 = vunpack.c.l.b16 %v67
    %v99 = vunpack.c.l.b16 %v68
    %v100 = vpack.c.b16 %v97, %v96
    %v101 = vpack.c.b16 %v99, %v98
    %v120 = vunpack.c.l.b16 %v69
    %v121 = vunpack.c.l.b16 %v70
    %v122 = vunpack.c.l.b16 %v71
    %v123 = vunpack.c.l.b16 %v72
    %v124 = vunpack.c.l.b16 %v73
    %v125 = vunpack.c.l.b16 %v74
    %v126 = vunpack.c.l.b16 %v75
    %v127 = vunpack.c.l.b16 %v76
    %v128 = vunpack.c.l.b16 %v77
    %v129 = vunpack.c.l.b16 %v78
    %v130 = vunpack.c.l.b16 %v79
    %v131 = vunpack.c.l.b16 %v80
    %v132 = vunpack.c.l.b16 %v81
    %v133 = vunpack.c.l.b16 %v82
    %v134 = vunpack.c.l.b16 %v83
    %v135 = vunpack.c.l.b16 %v84
    %v136 = vpack.c.b16 %v121, %v120
    %v137 = vpack.c.b16 %v123, %v122
    %v138 = vpack.c.b16 %v125, %v124
    %v139 = vpack.c.b16 %v127, %v126
    %v140 = vpack.c.b16 %v129, %v128
    %v141 = vpack.c.b16 %v131, %v130
    %v142 = vpack.c.b16 %v133, %v132
    %v143 = vpack.c.b16 %v135, %v134
    %152 = vmatprep.subr.bf16.mxu0 0
    %153 = vmatpush1.bf16.msra.mxu0 %v143
    %154 = vmatprep.subr.bf16.mxu0 0
    %155 = vmatpush1.bf16.msra.mxu0 %v142
    %156 = vmatprep.subr.bf16.mxu0 0
    %157 = vmatpush1.bf16.msra.mxu0 %v141
    %158 = vmatprep.subr.bf16.mxu0 0
    %159 = vmatpush1.bf16.msra.mxu0 %v140
    %160 = vmatprep.subr.bf16.mxu0 0
    %161 = vmatpush1.bf16.msra.mxu0 %v139
    %162 = vmatprep.subr.bf16.mxu0 0
    %163 = vmatpush1.bf16.msra.mxu0 %v138
    %164 = vmatprep.subr.bf16.mxu0 0
    %165 = vmatpush1.bf16.msra.mxu0 %v137
    %166 = vmatprep.subr.bf16.mxu0 0
    %167 = vmatpush1.bf16.msra.mxu0 %v136
    %168 = vmatprep.subr.bf16.mxu0 0
    %169 = vmatpush2.bf16.msra.mxu0 0
    %170 = vmatprep.subr.bf16.mxu0 0
    %171 = vmatpush2.bf16.msra.mxu0 0
    %172 = vmatprep.subr.bf16.mxu0 0
    %173 = vmatpush2.bf16.msra.mxu0 0
    %174 = vmatprep.subr.bf16.mxu0 0
    %175 = vmatpush2.bf16.msra.mxu0 0
    %176 = vmatprep.subr.bf16.mxu0 0
    %177 = vmatpush2.bf16.msra.mxu0 0
    %178 = vmatprep.subr.bf16.mxu0 0
    %179 = vmatpush2.bf16.msra.mxu0 0
    %180 = vmatprep.subr.bf16.mxu0 0
    %181 = vmatpush2.bf16.msra.mxu0 0
    %182 = vmatprep.subr.bf16.mxu0 0
    %183 = vmatpush2.bf16.msra.mxu0 0
    %184 = vmatprep.mubr.bf16.mxu0 0
    %185 = vmatmul.mubr.bf16.gmra.mxu0 %v100
    %v186 = vpop.f32.mrf.mxu0
    %v187 = vadd.f32 %v90, %v186
    %v188 = vpop.f32.mrf.mxu0
    %v189 = vpop.f32.mrf.mxu0
    %v190 = vadd.f32 %v90, %v189
    %v191 = vpop.f32.mrf.mxu0
    %192 = vmatprep.mubr.bf16.mxu0 0
    %193 = vmatmul.mubr.bf16.gmra.mxu0 %v101
    %v194 = vpop.f32.mrf.mxu0
    %v195 = vadd.f32 %v90, %v194
    %v196 = vpop.f32.mrf.mxu0
    %v197 = vpop.f32.mrf.mxu0
    %v198 = vadd.f32 %v90, %v197
    %v199 = vpop.f32.mrf.mxu0
    %200 = vdwg.mxu0
    %v201 = vpack.c.bf16 %v190, %v187
    %v202 = vpack.c.bf16 %v198, %v195
    %v203 = vld [vmem:[%s1] sm:$0xf]
    %v204 = vld [vmem:[%s1 + $0x4] sm:$0xf]
    %v205 = vld [vmem:[%s1 + $0x8] sm:$0xf]
    %v206 = vld [vmem:[%s1 + $0xc] sm:$0xf]
    %v208 = vunpack.c.l.b16 %v201
    %v209 = vunpack.c.h.b16 %v201
    %v210 = vpack.c.b16 %v208, %v208
    %v211 = vpack.c.b16 %v209, %v209
    %vm212 = vcmask 1040384
    %vm213 = vcmask 1044484
    %vm214 = vmor %vm212, %vm213
    %v215 = vrot.slane %v210, 7
    %v216 = vrot.slane %v215, 4
    %v217 = vrot.slane %v211, 7
    %v218 = vsel %vm214, %v216, %v217
    %v219 = vrot.slane %v217, 4
    %vm223 = vcmask 519169
    %224 = vst.msk [vmem:[#allocation2] sm:$0xe] %vm223, %v215
    %vm225 = vcmask 519168
    %226 = vst.msk [vmem:[#allocation2 + $0x4] sm:$0xf] %vm225, %v218
    %vm227 = vcmask 516096
    %228 = vst.msk [vmem:[#allocation2 + $0x8] sm:$0x1] %vm227, %v219
    %v231 = vrot.slane %v203, 7
    %v232 = vrot.slane %v231, 4
    %v233 = vrot.slane %v204, 7
    %v234 = vsel %vm214, %v232, %v233
    %v235 = vrot.slane %v233, 4
    %236 = vrot.lane.b32.xlu0 %v231, 64
    %v237 = vpop.permute.xlu0 %236
    %238 = vrot.lane.b32.xlu0 %v234, 64
    %v239 = vpop.permute.xlu0 %238
    %240 = vrot.lane.b32.xlu0 %v235, 64
    %v241 = vpop.permute.xlu0 %240
    %vm245 = vcmask 1043969
    %246 = vst.msk [vmem:[#allocation2] sm:$0xe] %vm245, %v237
    %vm247 = vcmask 1043968
    %248 = vst.msk [vmem:[#allocation2 + $0x4] sm:$0xf] %vm247, %v239
    %vm249 = vcmask 1040896
    %250 = vst.msk [vmem:[#allocation2 + $0x8] sm:$0x1] %vm249, %v241
    %v252 = vunpack.c.l.b16 %v202
    %v253 = vunpack.c.h.b16 %v202
    %v254 = vpack.c.b16 %v252, %v252
    %v255 = vpack.c.b16 %v253, %v253
    %vm256 = vcmask 1041408
    %vm257 = vcmask 1045508
    %vm258 = vmor %vm256, %vm257
    %v259 = vrot.slane %v254, 6
    %v260 = vrot.slane %v259, 4
    %v261 = vrot.slane %v255, 6
    %v262 = vsel %vm258, %v260, %v261
    %v263 = vrot.slane %v261, 4
    %vm267 = vcmask 519170
    %268 = vst.msk [vmem:[#allocation2 + $0x8] sm:$0xc] %vm267, %v259
    %269 = vst.msk [vmem:[#allocation2 + $0xc] sm:$0xf] %vm225, %v262
    %vm270 = vcmask 517120
    %271 = vst.msk [vmem:[#allocation2 + $0x10] sm:$0x3] %vm270, %v263
    %v274 = vrot.slane %v205, 6
    %v275 = vrot.slane %v274, 4
    %v276 = vrot.slane %v206, 6
    %v277 = vsel %vm258, %v275, %v276
    %v278 = vrot.slane %v276, 4
    %279 = vrot.lane.b32.xlu0 %v274, 64
    %v280 = vpop.permute.xlu0 %279
    %281 = vrot.lane.b32.xlu0 %v277, 64
    %v282 = vpop.permute.xlu0 %281
    %283 = vrot.lane.b32.xlu0 %v278, 64
    %v284 = vpop.permute.xlu0 %283
    %vm288 = vcmask 1043970
    %289 = vst.msk [vmem:[#allocation2 + $0x8] sm:$0xc] %vm288, %v280
    %290 = vst.msk [vmem:[#allocation2 + $0xc] sm:$0xf] %vm247, %v282
    %vm291 = vcmask 1041920
    %292 = vst.msk [vmem:[#allocation2 + $0x10] sm:$0x3] %vm291, %v284
    %v293 = vld [vmem:[#allocation2] sm:$0xf]
    %v294 = vld [vmem:[#allocation2 + $0x4] sm:$0xf]
    %v295 = vld [vmem:[#allocation2 + $0x8] sm:$0xf]
    %v296 = vld [vmem:[#allocation2 + $0xc] sm:$0xf]
    %v297 = vld [vmem:[#allocation2 + $0x10] sm:$0x7]
    %v298 = vld [vmem:[#allocation4] sm:$0xf]
    %v299 = vld [vmem:[#allocation4 + $0x4] sm:$0xf]
    %v300 = vld [vmem:[#allocation4 + $0x8] sm:$0xf]
    %v301 = vld [vmem:[#allocation4 + $0xc] sm:$0xf]
    %v302 = vld [vmem:[#allocation4 + $0x10] sm:$0xf]
    %v303 = vld [vmem:[#allocation4 + $0x14] sm:$0xf]
    %v304 = vld [vmem:[#allocation4 + $0x18] sm:$0xf]
    %v305 = vld [vmem:[#allocation4 + $0x1c] sm:$0xf]
    %v306 = vld [vmem:[#allocation4 + $0x20] sm:$0xf]
    %v307 = vld [vmem:[#allocation4 + $0x24] sm:$0xf]
    %v308 = vld [vmem:[#allocation4 + $0x28] sm:$0xf]
    %v309 = vld [vmem:[#allocation4 + $0x2c] sm:$0xf]
    %v310 = vld [vmem:[#allocation4 + $0x30] sm:$0xf]
    %v311 = vld [vmem:[#allocation4 + $0x34] sm:$0xf]
    %v312 = vld [vmem:[#allocation4 + $0x38] sm:$0xf]
    %v313 = vld [vmem:[#allocation4 + $0x3c] sm:$0xf]
    %v319 = vunpack.c.l.b16 %v293
    %v320 = vunpack.c.l.b16 %v294
    %v321 = vunpack.c.l.b16 %v295
    %v322 = vunpack.c.l.b16 %v296
    %v323 = vunpack.c.l.b16 %v297
    %v324 = vpack.c.b16 %v320, %v319
    %v325 = vpack.c.b16 %v322, %v321
    %v326 = vpack.c.b16 %v323, %v323
    %v346 = vunpack.c.l.b16 %v298
    %v347 = vunpack.c.l.b16 %v299
    %v348 = vunpack.c.l.b16 %v300
    %v349 = vunpack.c.l.b16 %v301
    %v350 = vunpack.c.l.b16 %v302
    %v351 = vunpack.c.l.b16 %v303
    %v352 = vunpack.c.l.b16 %v304
    %v353 = vunpack.c.l.b16 %v305
    %v354 = vunpack.c.l.b16 %v306
    %v355 = vunpack.c.l.b16 %v307
    %v356 = vunpack.c.l.b16 %v308
    %v357 = vunpack.c.l.b16 %v309
    %v358 = vunpack.c.l.b16 %v310
    %v359 = vunpack.c.l.b16 %v311
    %v360 = vunpack.c.l.b16 %v312
    %v361 = vunpack.c.l.b16 %v313
    %v362 = vpack.c.b16 %v347, %v346
    %v363 = vpack.c.b16 %v349, %v348
    %v364 = vpack.c.b16 %v351, %v350
    %v365 = vpack.c.b16 %v353, %v352
    %v366 = vpack.c.b16 %v355, %v354
    %v367 = vpack.c.b16 %v357, %v356
    %v368 = vpack.c.b16 %v359, %v358
    %v369 = vpack.c.b16 %v361, %v360
    %378 = vmatprep.subr.bf16.mxu0 0
    %379 = vmatpush1.bf16.msra.mxu0 %v369
    %380 = vmatprep.subr.bf16.mxu0 0
    %381 = vmatpush1.bf16.msra.mxu0 %v368
    %382 = vmatprep.subr.bf16.mxu0 0
    %383 = vmatpush1.bf16.msra.mxu0 %v367
    %384 = vmatprep.subr.bf16.mxu0 0
    %385 = vmatpush1.bf16.msra.mxu0 %v366
    %386 = vmatprep.subr.bf16.mxu0 0
    %387 = vmatpush1.bf16.msra.mxu0 %v365
    %388 = vmatprep.subr.bf16.mxu0 0
    %389 = vmatpush1.bf16.msra.mxu0 %v364
    %390 = vmatprep.subr.bf16.mxu0 0
    %391 = vmatpush1.bf16.msra.mxu0 %v363
    %392 = vmatprep.subr.bf16.mxu0 0
    %393 = vmatpush1.bf16.msra.mxu0 %v362
    %394 = vmatprep.subr.bf16.mxu0 0
    %395 = vmatpush2.bf16.msra.mxu0 0
    %396 = vmatprep.subr.bf16.mxu0 0
    %397 = vmatpush2.bf16.msra.mxu0 0
    %398 = vmatprep.subr.bf16.mxu0 0
    %399 = vmatpush2.bf16.msra.mxu0 0
    %400 = vmatprep.subr.bf16.mxu0 0
    %401 = vmatpush2.bf16.msra.mxu0 0
    %402 = vmatprep.subr.bf16.mxu0 0
    %403 = vmatpush2.bf16.msra.mxu0 0
    %404 = vmatprep.subr.bf16.mxu0 0
    %405 = vmatpush2.bf16.msra.mxu0 0
    %406 = vmatprep.subr.bf16.mxu0 0
    %407 = vmatpush2.bf16.msra.mxu0 0
    %408 = vmatprep.subr.bf16.mxu0 0
    %409 = vmatpush2.bf16.msra.mxu0 0
    %410 = vmatprep.mubr.bf16.mxu0 0
    %411 = vmatmul.mubr.bf16.gmra.mxu0 %v324
    %v412 = vpop.f32.mrf.mxu0
    %v413 = vadd.f32 0.0, %v412
    %v414 = vpop.f32.mrf.mxu0
    %v415 = vpop.f32.mrf.mxu0
    %v416 = vadd.f32 0.0, %v415
    %v417 = vpop.f32.mrf.mxu0
    %418 = vmatprep.mubr.bf16.mxu0 0
    %419 = vmatmul.mubr.bf16.gmra.mxu0 %v325
    %v420 = vpop.f32.mrf.mxu0
    %v421 = vadd.f32 0.0, %v420
    %v422 = vpop.f32.mrf.mxu0
    %v423 = vpop.f32.mrf.mxu0
    %v424 = vadd.f32 0.0, %v423
    %v425 = vpop.f32.mrf.mxu0
    %426 = vmatprep.mubr.bf16.mxu0 0
    %427 = vmatmul.mubr.bf16.gmra.mxu0 %v326
    %v428 = vpop.f32.mrf.mxu0
    %v429 = vadd.f32 0.0, %v428
    %v430 = vpop.f32.mrf.mxu0
    %v431 = vpop.f32.mrf.mxu0
    %v432 = vpop.f32.mrf.mxu0
    %433 = vdwg.mxu0
    %s434 = scalar_lea.vmem [#allocation4], 64
    %v435 = vld [vmem:[%s434] sm:$0xf]
    %v436 = vld [vmem:[%s434 + $0x4] sm:$0xf]
    %v437 = vld [vmem:[%s434 + $0x8] sm:$0xf]
    %v438 = vld [vmem:[%s434 + $0xc] sm:$0xf]
    %v439 = vld [vmem:[%s434 + $0x10] sm:$0xf]
    %v440 = vld [vmem:[%s434 + $0x14] sm:$0xf]
    %v441 = vld [vmem:[%s434 + $0x18] sm:$0xf]
    %v442 = vld [vmem:[%s434 + $0x1c] sm:$0xf]
    %v443 = vld [vmem:[%s434 + $0x20] sm:$0xf]
    %v444 = vld [vmem:[%s434 + $0x24] sm:$0xf]
    %v445 = vld [vmem:[%s434 + $0x28] sm:$0xf]
    %v446 = vld [vmem:[%s434 + $0x2c] sm:$0xf]
    %v447 = vld [vmem:[%s434 + $0x30] sm:$0xf]
    %v448 = vld [vmem:[%s434 + $0x34] sm:$0xf]
    %v449 = vld [vmem:[%s434 + $0x38] sm:$0xf]
    %v450 = vld [vmem:[%s434 + $0x3c] sm:$0xf]
    %v467 = vunpack.c.l.b16 %v435
    %v468 = vunpack.c.l.b16 %v436
    %v469 = vunpack.c.l.b16 %v437
    %v470 = vunpack.c.l.b16 %v438
    %v471 = vunpack.c.l.b16 %v439
    %v472 = vunpack.c.l.b16 %v440
    %v473 = vunpack.c.l.b16 %v441
    %v474 = vunpack.c.l.b16 %v442
    %v475 = vunpack.c.l.b16 %v443
    %v476 = vunpack.c.l.b16 %v444
    %v477 = vunpack.c.l.b16 %v445
    %v478 = vunpack.c.l.b16 %v446
    %v479 = vunpack.c.l.b16 %v447
    %v480 = vunpack.c.l.b16 %v448
    %v481 = vunpack.c.l.b16 %v449
    %v482 = vunpack.c.l.b16 %v450
    %v483 = vpack.c.b16 %v468, %v467
    %v484 = vpack.c.b16 %v470, %v469
    %v485 = vpack.c.b16 %v472, %v471
    %v486 = vpack.c.b16 %v474, %v473
    %v487 = vpack.c.b16 %v476, %v475
    %v488 = vpack.c.b16 %v478, %v477
    %v489 = vpack.c.b16 %v480, %v479
    %v490 = vpack.c.b16 %v482, %v481
    %499 = vmatprep.subr.bf16.mxu0 0
    %500 = vmatpush1.bf16.msra.mxu0 %v490
    %501 = vmatprep.subr.bf16.mxu0 0
    %502 = vmatpush1.bf16.msra.mxu0 %v489
    %503 = vmatprep.subr.bf16.mxu0 0
    %504 = vmatpush1.bf16.msra.mxu0 %v488
    %505 = vmatprep.subr.bf16.mxu0 0
    %506 = vmatpush1.bf16.msra.mxu0 %v487
    %507 = vmatprep.subr.bf16.mxu0 0
    %508 = vmatpush1.bf16.msra.mxu0 %v486
    %509 = vmatprep.subr.bf16.mxu0 0
    %510 = vmatpush1.bf16.msra.mxu0 %v485
    %511 = vmatprep.subr.bf16.mxu0 0
    %512 = vmatpush1.bf16.msra.mxu0 %v484
    %513 = vmatprep.subr.bf16.mxu0 0
    %514 = vmatpush1.bf16.msra.mxu0 %v483
    %515 = vmatprep.subr.bf16.mxu0 0
    %516 = vmatpush2.bf16.msra.mxu0 0
    %517 = vmatprep.subr.bf16.mxu0 0
    %518 = vmatpush2.bf16.msra.mxu0 0
    %519 = vmatprep.subr.bf16.mxu0 0
    %520 = vmatpush2.bf16.msra.mxu0 0
    %521 = vmatprep.subr.bf16.mxu0 0
    %522 = vmatpush2.bf16.msra.mxu0 0
    %523 = vmatprep.subr.bf16.mxu0 0
    %524 = vmatpush2.bf16.msra.mxu0 0
    %525 = vmatprep.subr.bf16.mxu0 0
    %526 = vmatpush2.bf16.msra.mxu0 0
    %527 = vmatprep.subr.bf16.mxu0 0
    %528 = vmatpush2.bf16.msra.mxu0 0
    %529 = vmatprep.subr.bf16.mxu0 0
    %530 = vmatpush2.bf16.msra.mxu0 0
    %531 = vmatprep.mubr.bf16.mxu0 0
    %532 = vmatmul.mubr.bf16.gmra.mxu0 %v324
    %v533 = vpop.f32.mrf.mxu0
    %v534 = vadd.f32 0.0, %v533
    %v535 = vpop.f32.mrf.mxu0
    %v536 = vpop.f32.mrf.mxu0
    %v537 = vadd.f32 0.0, %v536
    %v538 = vpop.f32.mrf.mxu0
    %539 = vmatprep.mubr.bf16.mxu0 0
    %540 = vmatmul.mubr.bf16.gmra.mxu0 %v325
    %v541 = vpop.f32.mrf.mxu0
    %v542 = vadd.f32 0.0, %v541
    %v543 = vpop.f32.mrf.mxu0
    %v544 = vpop.f32.mrf.mxu0
    %v545 = vadd.f32 0.0, %v544
    %v546 = vpop.f32.mrf.mxu0
    %547 = vmatprep.mubr.bf16.mxu0 0
    %548 = vmatmul.mubr.bf16.gmra.mxu0 %v326
    %v549 = vpop.f32.mrf.mxu0
    %v550 = vadd.f32 0.0, %v549
    %v551 = vpop.f32.mrf.mxu0
    %v552 = vpop.f32.mrf.mxu0
    %v553 = vpop.f32.mrf.mxu0
    %554 = vdwg.mxu0
    %s555 = scalar_lea.vmem [#allocation4], 128
    %v556 = vld [vmem:[%s555] sm:$0xf]
    %v557 = vld [vmem:[%s555 + $0x4] sm:$0xf]
    %v558 = vld [vmem:[%s555 + $0x8] sm:$0xf]
    %v559 = vld [vmem:[%s555 + $0xc] sm:$0xf]
    %v560 = vld [vmem:[%s555 + $0x10] sm:$0xf]
    %v561 = vld [vmem:[%s555 + $0x14] sm:$0xf]
    %v562 = vld [vmem:[%s555 + $0x18] sm:$0xf]
    %v563 = vld [vmem:[%s555 + $0x1c] sm:$0xf]
    %v564 = vld [vmem:[%s555 + $0x20] sm:$0xf]
    %v565 = vld [vmem:[%s555 + $0x24] sm:$0xf]
    %v566 = vld [vmem:[%s555 + $0x28] sm:$0xf]
    %v567 = vld [vmem:[%s555 + $0x2c] sm:$0xf]
    %v568 = vld [vmem:[%s555 + $0x30] sm:$0xf]
    %v569 = vld [vmem:[%s555 + $0x34] sm:$0xf]
    %v570 = vld [vmem:[%s555 + $0x38] sm:$0xf]
    %v571 = vld [vmem:[%s555 + $0x3c] sm:$0xf]
    %v588 = vunpack.c.l.b16 %v556
    %v589 = vunpack.c.l.b16 %v557
    %v590 = vunpack.c.l.b16 %v558
    %v591 = vunpack.c.l.b16 %v559
    %v592 = vunpack.c.l.b16 %v560
    %v593 = vunpack.c.l.b16 %v561
    %v594 = vunpack.c.l.b16 %v562
    %v595 = vunpack.c.l.b16 %v563
    %v596 = vunpack.c.l.b16 %v564
    %v597 = vunpack.c.l.b16 %v565
    %v598 = vunpack.c.l.b16 %v566
    %v599 = vunpack.c.l.b16 %v567
    %v600 = vunpack.c.l.b16 %v568
    %v601 = vunpack.c.l.b16 %v569
    %v602 = vunpack.c.l.b16 %v570
    %v603 = vunpack.c.l.b16 %v571
    %v604 = vpack.c.b16 %v589, %v588
    %v605 = vpack.c.b16 %v591, %v590
    %v606 = vpack.c.b16 %v593, %v592
    %v607 = vpack.c.b16 %v595, %v594
    %v608 = vpack.c.b16 %v597, %v596
    %v609 = vpack.c.b16 %v599, %v598
    %v610 = vpack.c.b16 %v601, %v600
    %v611 = vpack.c.b16 %v603, %v602
    %620 = vmatprep.subr.bf16.mxu0 0
    %621 = vmatpush1.bf16.msra.mxu0 %v611
    %622 = vmatprep.subr.bf16.mxu0 0
    %623 = vmatpush1.bf16.msra.mxu0 %v610
    %624 = vmatprep.subr.bf16.mxu0 0
    %625 = vmatpush1.bf16.msra.mxu0 %v609
    %626 = vmatprep.subr.bf16.mxu0 0
    %627 = vmatpush1.bf16.msra.mxu0 %v608
    %628 = vmatprep.subr.bf16.mxu0 0
    %629 = vmatpush1.bf16.msra.mxu0 %v607
    %630 = vmatprep.subr.bf16.mxu0 0
    %631 = vmatpush1.bf16.msra.mxu0 %v606
    %632 = vmatprep.subr.bf16.mxu0 0
    %633 = vmatpush1.bf16.msra.mxu0 %v605
    %634 = vmatprep.subr.bf16.mxu0 0
    %635 = vmatpush1.bf16.msra.mxu0 %v604
    %636 = vmatprep.subr.bf16.mxu0 0
    %637 = vmatpush2.bf16.msra.mxu0 0
    %638 = vmatprep.subr.bf16.mxu0 0
    %639 = vmatpush2.bf16.msra.mxu0 0
    %640 = vmatprep.subr.bf16.mxu0 0
    %641 = vmatpush2.bf16.msra.mxu0 0
    %642 = vmatprep.subr.bf16.mxu0 0
    %643 = vmatpush2.bf16.msra.mxu0 0
    %644 = vmatprep.subr.bf16.mxu0 0
    %645 = vmatpush2.bf16.msra.mxu0 0
    %646 = vmatprep.subr.bf16.mxu0 0
    %647 = vmatpush2.bf16.msra.mxu0 0
    %648 = vmatprep.subr.bf16.mxu0 0
    %649 = vmatpush2.bf16.msra.mxu0 0
    %650 = vmatprep.subr.bf16.mxu0 0
    %651 = vmatpush2.bf16.msra.mxu0 0
    %652 = vmatprep.mubr.bf16.mxu0 0
    %653 = vmatmul.mubr.bf16.gmra.mxu0 %v324
    %v654 = vpop.f32.mrf.mxu0
    %v655 = vadd.f32 0.0, %v654
    %v656 = vpop.f32.mrf.mxu0
    %v657 = vpop.f32.mrf.mxu0
    %v658 = vadd.f32 0.0, %v657
    %v659 = vpop.f32.mrf.mxu0
    %660 = vmatprep.mubr.bf16.mxu0 0
    %661 = vmatmul.mubr.bf16.gmra.mxu0 %v325
    %v662 = vpop.f32.mrf.mxu0
    %v663 = vadd.f32 0.0, %v662
    %v664 = vpop.f32.mrf.mxu0
    %v665 = vpop.f32.mrf.mxu0
    %v666 = vadd.f32 0.0, %v665
    %v667 = vpop.f32.mrf.mxu0
    %668 = vmatprep.mubr.bf16.mxu0 0
    %669 = vmatmul.mubr.bf16.gmra.mxu0 %v326
    %v670 = vpop.f32.mrf.mxu0
    %v671 = vadd.f32 0.0, %v670
    %v672 = vpop.f32.mrf.mxu0
    %v673 = vpop.f32.mrf.mxu0
    %v674 = vpop.f32.mrf.mxu0
    %675 = vdwg.mxu0
    %vm681 = vcmask 1046528
    %v682 = vrot.slane %v534, 1
    %v683 = vrot.slane %v537, 1
    %v684 = vsel %vm681, %v682, %v683
    %v685 = vrot.slane %v542, 1
    %v686 = vsel %vm681, %v683, %v685
    %v687 = vrot.slane %v545, 1
    %v688 = vsel %vm681, %v685, %v687
    %v689 = vrot.slane %v550, 1
    %v690 = vsel %vm681, %v687, %v689
    %v696 = vadd.f32 %v413, %v684
    %v697 = vadd.f32 %v416, %v686
    %v698 = vadd.f32 %v421, %v688
    %v699 = vadd.f32 %v424, %v690
    %v700 = vadd.f32 %v429, %v689
    %vm706 = vcmask 1045504
    %v707 = vrot.slane %v655, 2
    %v708 = vrot.slane %v658, 2
    %v709 = vsel %vm706, %v707, %v708
    %v710 = vrot.slane %v663, 2
    %v711 = vsel %vm706, %v708, %v710
    %v712 = vrot.slane %v666, 2
    %v713 = vsel %vm706, %v710, %v712
    %v714 = vrot.slane %v671, 2
    %v715 = vsel %vm706, %v712, %v714
    %v721 = vadd.f32 %v696, %v709
    %v722 = vadd.f32 %v697, %v711
    %v723 = vadd.f32 %v698, %v713
    %v724 = vadd.f32 %v699, %v715
    %v725 = vadd.f32 %v700, %v714
    %v726 = vld [vmem:[%s5] sm:$0x1]
    %v728 = vlaneseq
    %v729 = vshrl.u32 %v728, 7
    %v730 = vsub.s32 0, %v729
    %v731 = vrot.slane %v726, %v730
    %v733 = vadd.f32 %v721, %v731
    %v734 = vadd.f32 %v722, %v731
    %v735 = vadd.f32 %v723, %v731
    %v736 = vadd.f32 %v724, %v731
    %v737 = vadd.f32 %v725, %v731
    %v738 = vmax.f32 %v733, 0.0
    %v739 = vmax.f32 %v734, 0.0
    %v740 = vmax.f32 %v735, 0.0
    %v741 = vmax.f32 %v736, 0.0
    %v742 = vmax.f32 %v737, 0.0
    %v743 = vpack.c.bf16 %v739, %v738
    %v744 = vpack.c.bf16 %v741, %v740
    %v745 = vpack.c.bf16 %v742, %v742
    %v748 = vunpack.c.l.b16 %v743
    %v749 = vunpack.c.h.b16 %v743
    %v750 = vunpack.c.l.b16 %v744
    %v751 = vpack.c.b16 %v748, %v748
    %v752 = vpack.c.b16 %v749, %v749
    %v753 = vpack.c.b16 %v750, %v750
    %vm754 = vsmask.f32 256
    %vm755 = vsmask.f32 4368
    %vm756 = vmor %vm754, %vm755
    %v758 = vshrl.u32 %v751, 16
    %v760 = vrot.slane %v758, 7
    %v761 = vshll.u32 %v751, 16
    %v763 = vor.u32 %v760, %v761
    %v764 = vrot.slane %v760, 4
    %v766 = vshrl.u32 %v752, 16
    %v768 = vrot.slane %v766, 7
    %v769 = vshll.u32 %v752, 16
    %v771 = vor.u32 %v768, %v769
    %v772 = vsel %vm756, %v764, %v771
    %v773 = vrot.slane %v768, 4
    %v775 = vshll.u32 %v753, 16
    %v777 = vsel %vm756, %v773, %v775
    %781 = vst [vmem:[#allocation3] sm:$0xe] %v763
    %782 = vst [vmem:[#allocation3 + $0x4] sm:$0xf] %v772
    %783 = vst [vmem:[#allocation3 + $0x8] sm:$0x1] %v777
    %v785 = vunpack.c.h.b16 %v744
    %v786 = vunpack.c.l.b16 %v745
    %v787 = vpack.c.b16 %v785, %v785
    %v788 = vpack.c.b16 %v786, %v786
    %v789 = vshrl.u32 %v753, 16
    %v791 = vrot.slane %v789, 7
    %v792 = vor.u32 %v791, %v775
    %v793 = vrot.slane %v791, 4
    %v795 = vshrl.u32 %v787, 16
    %v797 = vrot.slane %v795, 7
    %v798 = vshll.u32 %v787, 16
    %v800 = vor.u32 %v797, %v798
    %v801 = vsel %vm756, %v793, %v800
    %v802 = vrot.slane %v797, 4
    %v804 = vshrl.u32 %v788, 16
    %v806 = vrot.slane %v804, 7
    %v807 = vshll.u32 %v788, 16
    %v809 = vor.u32 %v806, %v807
    %v810 = vsel %vm756, %v802, %v809
    %814 = vst [vmem:[#allocation3 + $0x8] sm:$0xc] %v792
    %815 = vst [vmem:[#allocation3 + $0xc] sm:$0xf] %v801
    %816 = vst [vmem:[#allocation3 + $0x10] sm:$0x3] %v810
    %v817 = vld [vmem:[#allocation3] sm:$0xf]
    %v818 = vld [vmem:[#allocation3 + $0x4] sm:$0xf]
    %v819 = vld [vmem:[#allocation3 + $0x8] sm:$0xf]
    %v820 = vld [vmem:[#allocation3 + $0xc] sm:$0xf]
    %v821 = vld [vmem:[#allocation3 + $0x10] sm:$0x7]
    %v822 = vld [vmem:[#allocation7] sm:$0xf]
    %v823 = vld [vmem:[#allocation7 + $0x4] sm:$0xf]
    %v824 = vld [vmem:[#allocation7 + $0x8] sm:$0xf]
    %v825 = vld [vmem:[#allocation7 + $0xc] sm:$0xf]
    %v826 = vld [vmem:[#allocation7 + $0x10] sm:$0xf]
    %v827 = vld [vmem:[#allocation7 + $0x14] sm:$0xf]
    %v828 = vld [vmem:[#allocation7 + $0x18] sm:$0xf]
    %v829 = vld [vmem:[#allocation7 + $0x1c] sm:$0xf]
    %v830 = vld [vmem:[#allocation7 + $0x20] sm:$0xf]
    %v831 = vld [vmem:[#allocation7 + $0x24] sm:$0xf]
    %v832 = vld [vmem:[#allocation7 + $0x28] sm:$0xf]
    %v833 = vld [vmem:[#allocation7 + $0x2c] sm:$0xf]
    %v834 = vld [vmem:[#allocation7 + $0x30] sm:$0xf]
    %v835 = vld [vmem:[#allocation7 + $0x34] sm:$0xf]
    %v836 = vld [vmem:[#allocation7 + $0x38] sm:$0xf]
    %v837 = vld [vmem:[#allocation7 + $0x3c] sm:$0xf]
    %v843 = vunpack.c.l.b16 %v817
    %v844 = vunpack.c.l.b16 %v818
    %v845 = vunpack.c.l.b16 %v819
    %v846 = vunpack.c.l.b16 %v820
    %v847 = vunpack.c.l.b16 %v821
    %v848 = vpack.c.b16 %v844, %v843
    %v849 = vpack.c.b16 %v846, %v845
    %v850 = vpack.c.b16 %v847, %v847
    %v870 = vunpack.c.l.b16 %v822
    %v871 = vunpack.c.l.b16 %v823
    %v872 = vunpack.c.l.b16 %v824
    %v873 = vunpack.c.l.b16 %v825
    %v874 = vunpack.c.l.b16 %v826
    %v875 = vunpack.c.l.b16 %v827
    %v876 = vunpack.c.l.b16 %v828
    %v877 = vunpack.c.l.b16 %v829
    %v878 = vunpack.c.l.b16 %v830
    %v879 = vunpack.c.l.b16 %v831
    %v880 = vunpack.c.l.b16 %v832
    %v881 = vunpack.c.l.b16 %v833
    %v882 = vunpack.c.l.b16 %v834
    %v883 = vunpack.c.l.b16 %v835
    %v884 = vunpack.c.l.b16 %v836
    %v885 = vunpack.c.l.b16 %v837
    %v886 = vpack.c.b16 %v871, %v870
    %v887 = vpack.c.b16 %v873, %v872
    %v888 = vpack.c.b16 %v875, %v874
    %v889 = vpack.c.b16 %v877, %v876
    %v890 = vpack.c.b16 %v879, %v878
    %v891 = vpack.c.b16 %v881, %v880
    %v892 = vpack.c.b16 %v883, %v882
    %v893 = vpack.c.b16 %v885, %v884
    %902 = vmatprep.subr.bf16.mxu0 0
    %903 = vmatpush1.bf16.msra.mxu0 %v893
    %904 = vmatprep.subr.bf16.mxu0 0
    %905 = vmatpush1.bf16.msra.mxu0 %v892
    %906 = vmatprep.subr.bf16.mxu0 0
    %907 = vmatpush1.bf16.msra.mxu0 %v891
    %908 = vmatprep.subr.bf16.mxu0 0
    %909 = vmatpush1.bf16.msra.mxu0 %v890
    %910 = vmatprep.subr.bf16.mxu0 0
    %911 = vmatpush1.bf16.msra.mxu0 %v889
    %912 = vmatprep.subr.bf16.mxu0 0
    %913 = vmatpush1.bf16.msra.mxu0 %v888
    %914 = vmatprep.subr.bf16.mxu0 0
    %915 = vmatpush1.bf16.msra.mxu0 %v887
    %916 = vmatprep.subr.bf16.mxu0 0
    %917 = vmatpush1.bf16.msra.mxu0 %v886
    %918 = vmatprep.subr.bf16.mxu0 0
    %919 = vmatpush2.bf16.msra.mxu0 0
    %920 = vmatprep.subr.bf16.mxu0 0
    %921 = vmatpush2.bf16.msra.mxu0 0
    %922 = vmatprep.subr.bf16.mxu0 0
    %923 = vmatpush2.bf16.msra.mxu0 0
    %924 = vmatprep.subr.bf16.mxu0 0
    %925 = vmatpush2.bf16.msra.mxu0 0
    %926 = vmatprep.subr.bf16.mxu0 0
    %927 = vmatpush2.bf16.msra.mxu0 0
    %928 = vmatprep.subr.bf16.mxu0 0
    %929 = vmatpush2.bf16.msra.mxu0 0
    %930 = vmatprep.subr.bf16.mxu0 0
    %931 = vmatpush2.bf16.msra.mxu0 0
    %932 = vmatprep.subr.bf16.mxu0 0
    %933 = vmatpush2.bf16.msra.mxu0 0
    %934 = vmatprep.mubr.bf16.mxu0 0
    %935 = vmatmul.mubr.bf16.gmra.mxu0 %v848
    %v936 = vpop.f32.mrf.mxu0
    %v937 = vadd.f32 0.0, %v936
    %v938 = vpop.f32.mrf.mxu0
    %v939 = vpop.f32.mrf.mxu0
    %v940 = vadd.f32 0.0, %v939
    %v941 = vpop.f32.mrf.mxu0
    %942 = vmatprep.mubr.bf16.mxu0 0
    %943 = vmatmul.mubr.bf16.gmra.mxu0 %v849
    %v944 = vpop.f32.mrf.mxu0
    %v945 = vadd.f32 0.0, %v944
    %v946 = vpop.f32.mrf.mxu0
    %v947 = vpop.f32.mrf.mxu0
    %v948 = vadd.f32 0.0, %v947
    %v949 = vpop.f32.mrf.mxu0
    %950 = vmatprep.mubr.bf16.mxu0 0
    %951 = vmatmul.mubr.bf16.gmra.mxu0 %v850
    %v952 = vpop.f32.mrf.mxu0
    %v953 = vadd.f32 0.0, %v952
    %v954 = vpop.f32.mrf.mxu0
    %v955 = vpop.f32.mrf.mxu0
    %v956 = vpop.f32.mrf.mxu0
    %957 = vdwg.mxu0
    %s958 = scalar_lea.vmem [#allocation7], 64
    %v959 = vld [vmem:[%s958] sm:$0xf]
    %v960 = vld [vmem:[%s958 + $0x4] sm:$0xf]
    %v961 = vld [vmem:[%s958 + $0x8] sm:$0xf]
    %v962 = vld [vmem:[%s958 + $0xc] sm:$0xf]
    %v963 = vld [vmem:[%s958 + $0x10] sm:$0xf]
    %v964 = vld [vmem:[%s958 + $0x14] sm:$0xf]
    %v965 = vld [vmem:[%s958 + $0x18] sm:$0xf]
    %v966 = vld [vmem:[%s958 + $0x1c] sm:$0xf]
    %v967 = vld [vmem:[%s958 + $0x20] sm:$0xf]
    %v968 = vld [vmem:[%s958 + $0x24] sm:$0xf]
    %v969 = vld [vmem:[%s958 + $0x28] sm:$0xf]
    %v970 = vld [vmem:[%s958 + $0x2c] sm:$0xf]
    %v971 = vld [vmem:[%s958 + $0x30] sm:$0xf]
    %v972 = vld [vmem:[%s958 + $0x34] sm:$0xf]
    %v973 = vld [vmem:[%s958 + $0x38] sm:$0xf]
    %v974 = vld [vmem:[%s958 + $0x3c] sm:$0xf]
    %v991 = vunpack.c.l.b16 %v959
    %v992 = vunpack.c.l.b16 %v960
    %v993 = vunpack.c.l.b16 %v961
    %v994 = vunpack.c.l.b16 %v962
    %v995 = vunpack.c.l.b16 %v963
    %v996 = vunpack.c.l.b16 %v964
    %v997 = vunpack.c.l.b16 %v965
    %v998 = vunpack.c.l.b16 %v966
    %v999 = vunpack.c.l.b16 %v967
    %v1000 = vunpack.c.l.b16 %v968
    %v1001 = vunpack.c.l.b16 %v969
    %v1002 = vunpack.c.l.b16 %v970
    %v1003 = vunpack.c.l.b16 %v971
    %v1004 = vunpack.c.l.b16 %v972
    %v1005 = vunpack.c.l.b16 %v973
    %v1006 = vunpack.c.l.b16 %v974
    %v1007 = vpack.c.b16 %v992, %v991
    %v1008 = vpack.c.b16 %v994, %v993
    %v1009 = vpack.c.b16 %v996, %v995
    %v1010 = vpack.c.b16 %v998, %v997
    %v1011 = vpack.c.b16 %v1000, %v999
    %v1012 = vpack.c.b16 %v1002, %v1001
    %v1013 = vpack.c.b16 %v1004, %v1003
    %v1014 = vpack.c.b16 %v1006, %v1005
    %1023 = vmatprep.subr.bf16.mxu0 0
    %1024 = vmatpush1.bf16.msra.mxu0 %v1014
    %1025 = vmatprep.subr.bf16.mxu0 0
    %1026 = vmatpush1.bf16.msra.mxu0 %v1013
    %1027 = vmatprep.subr.bf16.mxu0 0
    %1028 = vmatpush1.bf16.msra.mxu0 %v1012
    %1029 = vmatprep.subr.bf16.mxu0 0
    %1030 = vmatpush1.bf16.msra.mxu0 %v1011
    %1031 = vmatprep.subr.bf16.mxu0 0
    %1032 = vmatpush1.bf16.msra.mxu0 %v1010
    %1033 = vmatprep.subr.bf16.mxu0 0
    %1034 = vmatpush1.bf16.msra.mxu0 %v1009
    %1035 = vmatprep.subr.bf16.mxu0 0
    %1036 = vmatpush1.bf16.msra.mxu0 %v1008
    %1037 = vmatprep.subr.bf16.mxu0 0
    %1038 = vmatpush1.bf16.msra.mxu0 %v1007
    %1039 = vmatprep.subr.bf16.mxu0 0
    %1040 = vmatpush2.bf16.msra.mxu0 0
    %1041 = vmatprep.subr.bf16.mxu0 0
    %1042 = vmatpush2.bf16.msra.mxu0 0
    %1043 = vmatprep.subr.bf16.mxu0 0
    %1044 = vmatpush2.bf16.msra.mxu0 0
    %1045 = vmatprep.subr.bf16.mxu0 0
    %1046 = vmatpush2.bf16.msra.mxu0 0
    %1047 = vmatprep.subr.bf16.mxu0 0
    %1048 = vmatpush2.bf16.msra.mxu0 0
    %1049 = vmatprep.subr.bf16.mxu0 0
    %1050 = vmatpush2.bf16.msra.mxu0 0
    %1051 = vmatprep.subr.bf16.mxu0 0
    %1052 = vmatpush2.bf16.msra.mxu0 0
    %1053 = vmatprep.subr.bf16.mxu0 0
    %1054 = vmatpush2.bf16.msra.mxu0 0
    %1055 = vmatprep.mubr.bf16.mxu0 0
    %1056 = vmatmul.mubr.bf16.gmra.mxu0 %v848
    %v1057 = vpop.f32.mrf.mxu0
    %v1058 = vadd.f32 0.0, %v1057
    %v1059 = vpop.f32.mrf.mxu0
    %v1060 = vpop.f32.mrf.mxu0
    %v1061 = vadd.f32 0.0, %v1060
    %v1062 = vpop.f32.mrf.mxu0
    %1063 = vmatprep.mubr.bf16.mxu0 0
    %1064 = vmatmul.mubr.bf16.gmra.mxu0 %v849
    %v1065 = vpop.f32.mrf.mxu0
    %v1066 = vadd.f32 0.0, %v1065
    %v1067 = vpop.f32.mrf.mxu0
    %v1068 = vpop.f32.mrf.mxu0
    %v1069 = vadd.f32 0.0, %v1068
    %v1070 = vpop.f32.mrf.mxu0
    %1071 = vmatprep.mubr.bf16.mxu0 0
    %1072 = vmatmul.mubr.bf16.gmra.mxu0 %v850
    %v1073 = vpop.f32.mrf.mxu0
    %v1074 = vadd.f32 0.0, %v1073
    %v1075 = vpop.f32.mrf.mxu0
    %v1076 = vpop.f32.mrf.mxu0
    %v1077 = vpop.f32.mrf.mxu0
    %1078 = vdwg.mxu0
    %s1079 = scalar_lea.vmem [#allocation7], 128
    %v1080 = vld [vmem:[%s1079] sm:$0xf]
    %v1081 = vld [vmem:[%s1079 + $0x4] sm:$0xf]
    %v1082 = vld [vmem:[%s1079 + $0x8] sm:$0xf]
    %v1083 = vld [vmem:[%s1079 + $0xc] sm:$0xf]
    %v1084 = vld [vmem:[%s1079 + $0x10] sm:$0xf]
    %v1085 = vld [vmem:[%s1079 + $0x14] sm:$0xf]
    %v1086 = vld [vmem:[%s1079 + $0x18] sm:$0xf]
    %v1087 = vld [vmem:[%s1079 + $0x1c] sm:$0xf]
    %v1088 = vld [vmem:[%s1079 + $0x20] sm:$0xf]
    %v1089 = vld [vmem:[%s1079 + $0x24] sm:$0xf]
    %v1090 = vld [vmem:[%s1079 + $0x28] sm:$0xf]
    %v1091 = vld [vmem:[%s1079 + $0x2c] sm:$0xf]
    %v1092 = vld [vmem:[%s1079 + $0x30] sm:$0xf]
    %v1093 = vld [vmem:[%s1079 + $0x34] sm:$0xf]
    %v1094 = vld [vmem:[%s1079 + $0x38] sm:$0xf]
    %v1095 = vld [vmem:[%s1079 + $0x3c] sm:$0xf]
    %v1112 = vunpack.c.l.b16 %v1080
    %v1113 = vunpack.c.l.b16 %v1081
    %v1114 = vunpack.c.l.b16 %v1082
    %v1115 = vunpack.c.l.b16 %v1083
    %v1116 = vunpack.c.l.b16 %v1084
    %v1117 = vunpack.c.l.b16 %v1085
    %v1118 = vunpack.c.l.b16 %v1086
    %v1119 = vunpack.c.l.b16 %v1087
    %v1120 = vunpack.c.l.b16 %v1088
    %v1121 = vunpack.c.l.b16 %v1089
    %v1122 = vunpack.c.l.b16 %v1090
    %v1123 = vunpack.c.l.b16 %v1091
    %v1124 = vunpack.c.l.b16 %v1092
    %v1125 = vunpack.c.l.b16 %v1093
    %v1126 = vunpack.c.l.b16 %v1094
    %v1127 = vunpack.c.l.b16 %v1095
    %v1128 = vpack.c.b16 %v1113, %v1112
    %v1129 = vpack.c.b16 %v1115, %v1114
    %v1130 = vpack.c.b16 %v1117, %v1116
    %v1131 = vpack.c.b16 %v1119, %v1118
    %v1132 = vpack.c.b16 %v1121, %v1120
    %v1133 = vpack.c.b16 %v1123, %v1122
    %v1134 = vpack.c.b16 %v1125, %v1124
    %v1135 = vpack.c.b16 %v1127, %v1126
    %1144 = vmatprep.subr.bf16.mxu0 0
    %1145 = vmatpush1.bf16.msra.mxu0 %v1135
    %1146 = vmatprep.subr.bf16.mxu0 0
    %1147 = vmatpush1.bf16.msra.mxu0 %v1134
    %1148 = vmatprep.subr.bf16.mxu0 0
    %1149 = vmatpush1.bf16.msra.mxu0 %v1133
    %1150 = vmatprep.subr.bf16.mxu0 0
    %1151 = vmatpush1.bf16.msra.mxu0 %v1132
    %1152 = vmatprep.subr.bf16.mxu0 0
    %1153 = vmatpush1.bf16.msra.mxu0 %v1131
    %1154 = vmatprep.subr.bf16.mxu0 0
    %1155 = vmatpush1.bf16.msra.mxu0 %v1130
    %1156 = vmatprep.subr.bf16.mxu0 0
    %1157 = vmatpush1.bf16.msra.mxu0 %v1129
    %1158 = vmatprep.subr.bf16.mxu0 0
    %1159 = vmatpush1.bf16.msra.mxu0 %v1128
    %1160 = vmatprep.subr.bf16.mxu0 0
    %1161 = vmatpush2.bf16.msra.mxu0 0
    %1162 = vmatprep.subr.bf16.mxu0 0
    %1163 = vmatpush2.bf16.msra.mxu0 0
    %1164 = vmatprep.subr.bf16.mxu0 0
    %1165 = vmatpush2.bf16.msra.mxu0 0
    %1166 = vmatprep.subr.bf16.mxu0 0
    %1167 = vmatpush2.bf16.msra.mxu0 0
    %1168 = vmatprep.subr.bf16.mxu0 0
    %1169 = vmatpush2.bf16.msra.mxu0 0
    %1170 = vmatprep.subr.bf16.mxu0 0
    %1171 = vmatpush2.bf16.msra.mxu0 0
    %1172 = vmatprep.subr.bf16.mxu0 0
    %1173 = vmatpush2.bf16.msra.mxu0 0
    %1174 = vmatprep.subr.bf16.mxu0 0
    %1175 = vmatpush2.bf16.msra.mxu0 0
    %1176 = vmatprep.mubr.bf16.mxu0 0
    %1177 = vmatmul.mubr.bf16.gmra.mxu0 %v848
    %v1178 = vpop.f32.mrf.mxu0
    %v1179 = vadd.f32 0.0, %v1178
    %v1180 = vpop.f32.mrf.mxu0
    %v1181 = vpop.f32.mrf.mxu0
    %v1182 = vadd.f32 0.0, %v1181
    %v1183 = vpop.f32.mrf.mxu0
    %1184 = vmatprep.mubr.bf16.mxu0 0
    %1185 = vmatmul.mubr.bf16.gmra.mxu0 %v849
    %v1186 = vpop.f32.mrf.mxu0
    %v1187 = vadd.f32 0.0, %v1186
    %v1188 = vpop.f32.mrf.mxu0
    %v1189 = vpop.f32.mrf.mxu0
    %v1190 = vadd.f32 0.0, %v1189
    %v1191 = vpop.f32.mrf.mxu0
    %1192 = vmatprep.mubr.bf16.mxu0 0
    %1193 = vmatmul.mubr.bf16.gmra.mxu0 %v850
    %v1194 = vpop.f32.mrf.mxu0
    %v1195 = vadd.f32 0.0, %v1194
    %v1196 = vpop.f32.mrf.mxu0
    %v1197 = vpop.f32.mrf.mxu0
    %v1198 = vpop.f32.mrf.mxu0
    %1199 = vdwg.mxu0
    %v1205 = vrot.slane %v1058, 1
    %v1206 = vrot.slane %v1061, 1
    %v1207 = vsel %vm681, %v1205, %v1206
    %v1208 = vrot.slane %v1066, 1
    %v1209 = vsel %vm681, %v1206, %v1208
    %v1210 = vrot.slane %v1069, 1
    %v1211 = vsel %vm681, %v1208, %v1210
    %v1212 = vrot.slane %v1074, 1
    %v1213 = vsel %vm681, %v1210, %v1212
    %v1219 = vadd.f32 %v937, %v1207
    %v1220 = vadd.f32 %v940, %v1209
    %v1221 = vadd.f32 %v945, %v1211
    %v1222 = vadd.f32 %v948, %v1213
    %v1223 = vadd.f32 %v953, %v1212
    %v1229 = vrot.slane %v1179, 2
    %v1230 = vrot.slane %v1182, 2
    %v1231 = vsel %vm706, %v1229, %v1230
    %v1232 = vrot.slane %v1187, 2
    %v1233 = vsel %vm706, %v1230, %v1232
    %v1234 = vrot.slane %v1190, 2
    %v1235 = vsel %vm706, %v1232, %v1234
    %v1236 = vrot.slane %v1195, 2
    %v1237 = vsel %vm706, %v1234, %v1236
    %v1243 = vadd.f32 %v1219, %v1231
    %v1244 = vadd.f32 %v1220, %v1233
    %v1245 = vadd.f32 %v1221, %v1235
    %v1246 = vadd.f32 %v1222, %v1237
    %v1247 = vadd.f32 %v1223, %v1236
    %v1248 = vld [vmem:[%s7] sm:$0x1]
    %v1250 = vlaneseq
    %v1251 = vshrl.u32 %v1250, 7
    %v1252 = vsub.s32 0, %v1251
    %v1253 = vrot.slane %v1248, %v1252
    %v1255 = vadd.f32 %v1243, %v1253
    %v1256 = vadd.f32 %v1244, %v1253
    %v1257 = vadd.f32 %v1245, %v1253
    %v1258 = vadd.f32 %v1246, %v1253
    %v1259 = vadd.f32 %v1247, %v1253
    %v1260 = vmax.f32 %v1255, 0.0
    %v1261 = vmax.f32 %v1256, 0.0
    %v1262 = vmax.f32 %v1257, 0.0
    %v1263 = vmax.f32 %v1258, 0.0
    %v1264 = vmax.f32 %v1259, 0.0
    %1265 = vst [vmem:[#allocation9 - $0x1] sm:$0xfe] %v1260
    %1266 = vst [vmem:[#allocation9 + $0x7] sm:$0xff] %v1261
    %1267 = vst [vmem:[#allocation9 + $0xf] sm:$0x1] %v1262
    %1268 = vst [vmem:[#allocation9 + $0xd] sm:$0xf8] %v1262
    %1269 = vst [vmem:[#allocation9 + $0x15] sm:$0xff] %v1263
    %1270 = vst [vmem:[#allocation9 + $0x1d] sm:$0x7] %v1264
    // Predicated region
    $region42: #{tpu_custom_call.1} parent=1 // pred_check
      _
    $region43: #{tpu_custom_call.1} parent=1 // pred_check_branch
      %1272 = sbr.rel (0) target = $region45
    $region44: #{tpu_custom_call.1} parent=1 // pred_region
      %s1274 = ssub.s32 512, 512
      %1275 = vsyncadd [#allocation6], %s1274
      %s1276 = sshll.u32 [#allocation9], 4
      %s1277 = int_to_ptr.vmem [resolvable:$true] %s1276
      %1282 = dma.vmem_to_hbm [thread:$0]  %s1277, 512, %s8, [#allocation6], 128, 128, 8
    $region45: #{tpu_custom_call.1} parent=1 // pred_fallthru
      _
    // Predicated region
    $region46: #{tpu_custom_call.1} parent=1 // pred_check
      _
    $region47: #{tpu_custom_call.1} parent=1 // pred_check_branch
      %1284 = sbr.rel (0) target = $region49
    $region48: #{tpu_custom_call.1} parent=1 // pred_region
      %1285 = dma.done [#allocation6], 512
    $region49: #{tpu_custom_call.1} parent=1 // pred_fallthru
      _
    %1286 = vsyncpa [#allocation5], 1
    %1287 = vsyncpa [#allocation8], 1
    %1288 = vsyncpa [#allocation6], 1

</llo_original>
